<compile_context>
chip_gen: v7x
topology: tpu7x:2x2x1
jax: 0.10.0
libtpu: 0.0.40
codegen_flags: <defaults>
</compile_context>

<pallas_src>
import functools

import jax
import jax.numpy as jnp
from jax import lax
from jax.experimental import pallas as pl
from jax.experimental.pallas import tpu as pltpu

NUM_CLASSES = 3  # ['entailment', 'neutral', 'contradiction']


def _make_vr_kernel(num_classes, max_points):
    c = int(num_classes)
    p = int(max_points)

    def kernel(counts_sm,     # SMEM (C,) int32  (scalar prefetch)
               feats_ref,     # VMEM (C, P, D)   class-major gathered points
               dist_ref):     # VMEM (C, P, P)   out: masked VR filtration distances
        # Static loop over the (tiny, fixed) class count: one MXU matmul + one sqrt
        # + one masked store per class, all inside a single grid step.
        for ci in range(c):
            count_c = counts_sm[ci]
            x = feats_ref[ci]                                          # (P, D) f32

            # Contract the last dims of both operands (NT matmul on the MXU, f32
            # accumulate) -> no explicit transpose of the (P, D) block.
            xy = lax.dot_general(x, x, (((1,), (1,)), ((), ())),
                                 preferred_element_type=jnp.float32)   # (P, P)
            sq = jnp.sum(x * x, axis=-1, keepdims=True)                # (P, 1)
            d2 = jnp.maximum(sq + sq.T - 2.0 * xy, 0.0)
            # TODO(synk): if a backward pass is ever added, clamp d2 with a small
            # epsilon before sqrt (derivative at the zero diagonal is inf).
            dist = jnp.sqrt(d2)

            # Slots beyond this class' member count are padding (spill-over from other
            # classes in the class-sorted gather); push them to +inf so they can never
            # enter the filtration.  Narrow iotas only -- the (P, P) broadcast happens
            # inside the select.
            row_in = lax.broadcasted_iota(jnp.int32, (p, 1), 0) < count_c   # (P, 1)
            col_in = lax.broadcasted_iota(jnp.int32, (1, p), 1) < count_c   # (1, P)
            dist_ref[ci] = jnp.where(row_in & col_in, dist, jnp.inf)

    return kernel


@functools.partial(jax.jit, static_argnames=("min_samples_per_class",
                                             "loss_scale_factor",
                                             "max_points_per_class"))
def topological_persistence_loss(latent_features, labels,
                                 cur_birth, cur_death, cur_mask,
                                 tgt_birth, tgt_death, tgt_mask,
                                 *, min_samples_per_class=200,
                                 loss_scale_factor=1.0,
                                 max_points_per_class=128):
    n, d = latent_features.shape
    p = int(max_points_per_class)
    c = NUM_CLASSES

    labels = labels.astype(jnp.int32)
    class_ids = jnp.arange(c, dtype=jnp.int32)
    counts = jnp.sum(labels[None, :] == class_ids[:, None], axis=1).astype(jnp.int32)  # (C,)

    # One class-major ordering of all points (single argsort), then ONE vectorized
    # gather of the first P members of every class (original order preserved).
    # TODO(synk): torch.randperm subsampling is replaced by a deterministic
    # "first max_points_per_class members of the class" selection.
    order = jnp.argsort(labels * jnp.int32(n) + jnp.arange(n, dtype=jnp.int32)).astype(jnp.int32)
    order = jnp.concatenate([order, jnp.zeros((p,), jnp.int32)])       # pad: indices stay in range
    offsets = jnp.concatenate([jnp.zeros((1,), jnp.int32), jnp.cumsum(counts)[:-1]])
    idx = order[offsets[:, None] + jnp.arange(p, dtype=jnp.int32)[None, :]]  # (C, P)
    feats = latent_features.astype(jnp.float32)[idx]                   # (C, P, D) single gather

    # ---- Pallas kernel: per-class masked Vietoris-Rips filtration distances --------
    grid_spec = pltpu.PrefetchScalarGridSpec(
        num_scalar_prefetch=1,
        grid=(1,),
        in_specs=[pl.BlockSpec((c, p, d), lambda i, cnt: (0, 0, 0))],
        out_specs=pl.BlockSpec((c, p, p), lambda i, cnt: (0, 0, 0)),
    )
    vr_dists = pl.pallas_call(
        _make_vr_kernel(c, p),
        out_shape=jax.ShapeDtypeStruct((c, p, p), jnp.float32),
        grid_spec=grid_spec,
        compiler_params=pltpu.CompilerParams(dimension_semantics=("arbitrary",)),
    )(counts, feats)
    # vr_dists feed the external (untranslatable) persistent-homology step that produces
    # the "current" H1 diagrams supplied as inputs below.

    # ---- total-persistence loss (tiny (C,)-sized math; plain XLA in the wrapper) ----
    cur_tp = jnp.sum(cur_mask.astype(jnp.float32)
                     * (cur_death - cur_birth).astype(jnp.float32), axis=-1)   # (C,)
    tgt_tp = jnp.sum(tgt_mask.astype(jnp.float32)
                     * (tgt_death - tgt_birth).astype(jnp.float32), axis=-1)   # (C,)
    class_loss = (cur_tp - tgt_tp) ** 2 * jnp.float32(loss_scale_factor)       # (C,)

    valid = counts >= jnp.int32(min_samples_per_class)
    n_valid = jnp.sum(valid.astype(jnp.float32))
    total = jnp.sum(jnp.where(valid, class_loss, 0.0))
    loss = jnp.where(n_valid > 0, total / jnp.maximum(n_valid, 1.0), 0.0)

    return loss, vr_dists


if __name__ == "__main__":
    key = jax.random.PRNGKey(0)
    N, D = 256, 32            # batch of latent features, latent dim
    P = 128                   # max points per class (lane-aligned)
    P_CUR, P_TGT = 128, 128   # padded diagram sizes (pairs per class)
    k1, k2, k3, k4, k5, k6 = jax.random.split(key, 6)

    latent = jax.random.normal(k1, (N, D), dtype=jnp.float32)
    labels = jax.random.randint(k2, (N,), 0, NUM_CLASSES, dtype=jnp.int32)

    # Synthetic "current" H1 diagrams (stand-in for the VietorisRipsComplex output).
    cur_birth = jax.random.uniform(k3, (NUM_CLASSES, P_CUR), dtype=jnp.float32)
    cur_death = cur_birth + jax.random.uniform(k4, (NUM_CLASSES, P_CUR), dtype=jnp.float32)
    n_cur = jnp.array([[40.0], [64.0], [12.0]], dtype=jnp.float32)
    cur_mask = (jnp.arange(P_CUR, dtype=jnp.float32)[None, :] < n_cur).astype(jnp.float32)

    # Synthetic "target" prototype H1 diagrams (the module loads these from a pickle).
    tgt_birth = jax.random.uniform(k5, (NUM_CLASSES, P_TGT), dtype=jnp.float32)
    tgt_death = tgt_birth + jax.random.uniform(k6, (NUM_CLASSES, P_TGT), dtype=jnp.float32)
    n_tgt = jnp.array([[50.0], [30.0], [70.0]], dtype=jnp.float32)
    tgt_mask = (jnp.arange(P_TGT, dtype=jnp.float32)[None, :] < n_tgt).astype(jnp.float32)

    loss, vr_dists = topological_persistence_loss(
        latent, labels,
        cur_birth, cur_death, cur_mask,
        tgt_birth, tgt_death, tgt_mask,
        min_samples_per_class=32,
        loss_scale_factor=1.0,
        max_points_per_class=P,
    )
    jax.block_until_ready((loss, vr_dists))
    print("KERNEL_OK")
</pallas_src>

<mosaic_0001>
module attributes {stable_mosaic.version = 11 : i64} {
  func.func @kernel(%arg0: i32, %arg1: memref<3xi32, #tpu.memory_space<smem>>, %arg2: memref<3x128x32xf32, #tpu.memory_space<vmem>>, %arg3: memref<3x128x128xf32, #tpu.memory_space<vmem>>) attributes {dimension_semantics = [#tpu.dimension_semantics<arbitrary>], iteration_bounds = array<i64: 1>, scalar_prefetch = 1 : i64, scratch_operands = 0 : i64, tpu.core_type = #tpu.core_type<tc>, window_params = [{pipeline_mode = #tpu.pipeline_mode<synchronous>, transform_indices = @transform_0, window_bounds = array<i64: 3, 128, 32>}, {pipeline_mode = #tpu.pipeline_mode<synchronous>, transform_indices = @transform_1, window_bounds = array<i64: 3, 128, 128>}]} {
    %c0 = arith.constant 0 : index
    %0 = memref.load %arg1[%c0] : memref<3xi32, #tpu.memory_space<smem>>
    %c0_0 = arith.constant 0 : index
    %c0_1 = arith.constant 0 : index
    %c0_2 = arith.constant 0 : index
    %1 = vector.load %arg2[%c0_0, %c0_1, %c0_2] : memref<3x128x32xf32, #tpu.memory_space<vmem>>, vector<1x128x32xf32>
    %2 = vector.shape_cast %1 : vector<1x128x32xf32> to vector<128x32xf32>
    %cst = arith.constant dense<0.000000e+00> : vector<128x128xf32>
    %3 = tpu.matmul %2, %2, %cst {dimension_numbers = #tpu.dot_dimension_numbers<[1], [1], [0], [0], [0, 0, 1, 0], [], []>} : vector<128x32xf32>, vector<128x32xf32>, vector<128x128xf32> -> vector<128x128xf32>
    %4 = arith.mulf %2, %2 : vector<128x32xf32>
    %cst_3 = arith.constant dense<0.000000e+00> : vector<128xf32>
    %5 = vector.multi_reduction <add>, %4, %cst_3 [1] : vector<128x32xf32> to vector<128xf32>
    %6 = vector.shape_cast %5 : vector<128xf32> to vector<128x1xf32>
    %7 = tpu.transpose %6, [1, 0] : vector<128x1xf32> -> vector<1x128xf32>
    %8 = vector.broadcast %6 : vector<128x1xf32> to vector<128x128xf32>
    %9 = vector.broadcast %7 : vector<1x128xf32> to vector<128x128xf32>
    %10 = arith.addf %8, %9 : vector<128x128xf32>
    %cst_4 = arith.constant 2.000000e+00 : f32
    %11 = vector.broadcast %cst_4 : f32 to vector<128x128xf32>
    %12 = arith.mulf %11, %3 : vector<128x128xf32>
    %13 = arith.subf %10, %12 : vector<128x128xf32>
    %cst_5 = arith.constant 0.000000e+00 : f32
    %14 = vector.broadcast %cst_5 : f32 to vector<128x128xf32>
    %15 = arith.maximumf %13, %14 : vector<128x128xf32>
    %16 = math.sqrt %15 : vector<128x128xf32>
    %17 = tpu.iota {dimensions = array<i32: 0>} : vector<128x1xi32>
    %18 = vector.broadcast %0 : i32 to vector<128x1xi32>
    %19 = arith.cmpi slt, %17, %18 : vector<128x1xi32>
    %20 = tpu.iota {dimensions = array<i32: 1>} : vector<1x128xi32>
    %21 = vector.broadcast %0 : i32 to vector<1x128xi32>
    %22 = arith.cmpi slt, %20, %21 : vector<1x128xi32>
    %23 = vector.broadcast %19 : vector<128x1xi1> to vector<128x128xi1>
    %24 = vector.broadcast %22 : vector<1x128xi1> to vector<128x128xi1>
    %25 = arith.andi %23, %24 : vector<128x128xi1>
    %cst_6 = arith.constant 0x7F800000 : f32
    %26 = vector.broadcast %cst_6 : f32 to vector<128x128xf32>
    %27 = arith.select %25, %16, %26 : vector<128x128xi1>, vector<128x128xf32>
    %c0_7 = arith.constant 0 : index
    %c0_8 = arith.constant 0 : index
    %c0_9 = arith.constant 0 : index
    %28 = vector.load %arg3[%c0_7, %c0_8, %c0_9] : memref<3x128x128xf32, #tpu.memory_space<vmem>>, vector<1x128x128xf32>
    %29 = vector.shape_cast %28 : vector<1x128x128xf32> to vector<128x128xf32>
    %30 = vector.shape_cast %27 : vector<128x128xf32> to vector<1x128x128xf32>
    tpu.vector_store %arg3[%c0_7, %c0_8, %c0_9], %30 {strides = array<i32>} : memref<3x128x128xf32, #tpu.memory_space<vmem>>, vector<1x128x128xf32>,
    %c1 = arith.constant 1 : index
    %31 = memref.load %arg1[%c1] : memref<3xi32, #tpu.memory_space<smem>>
    %c1_10 = arith.constant 1 : index
    %c0_11 = arith.constant 0 : index
    %c0_12 = arith.constant 0 : index
    %32 = vector.load %arg2[%c1_10, %c0_11, %c0_12] : memref<3x128x32xf32, #tpu.memory_space<vmem>>, vector<1x128x32xf32>
    %33 = vector.shape_cast %32 : vector<1x128x32xf32> to vector<128x32xf32>
    %cst_13 = arith.constant dense<0.000000e+00> : vector<128x128xf32>
    %34 = tpu.matmul %33, %33, %cst_13 {dimension_numbers = #tpu.dot_dimension_numbers<[1], [1], [0], [0], [0, 0, 1, 0], [], []>} : vector<128x32xf32>, vector<128x32xf32>, vector<128x128xf32> -> vector<128x128xf32>
    %35 = arith.mulf %33, %33 : vector<128x32xf32>
    %cst_14 = arith.constant dense<0.000000e+00> : vector<128xf32>
    %36 = vector.multi_reduction <add>, %35, %cst_14 [1] : vector<128x32xf32> to vector<128xf32>
    %37 = vector.shape_cast %36 : vector<128xf32> to vector<128x1xf32>
    %38 = tpu.transpose %37, [1, 0] : vector<128x1xf32> -> vector<1x128xf32>
    %39 = vector.broadcast %37 : vector<128x1xf32> to vector<128x128xf32>
    %40 = vector.broadcast %38 : vector<1x128xf32> to vector<128x128xf32>
    %41 = arith.addf %39, %40 : vector<128x128xf32>
    %cst_15 = arith.constant 2.000000e+00 : f32
    %42 = vector.broadcast %cst_15 : f32 to vector<128x128xf32>
    %43 = arith.mulf %42, %34 : vector<128x128xf32>
    %44 = arith.subf %41, %43 : vector<128x128xf32>
    %cst_16 = arith.constant 0.000000e+00 : f32
    %45 = vector.broadcast %cst_16 : f32 to vector<128x128xf32>
    %46 = arith.maximumf %44, %45 : vector<128x128xf32>
    %47 = math.sqrt %46 : vector<128x128xf32>
    %48 = tpu.iota {dimensions = array<i32: 0>} : vector<128x1xi32>
    %49 = vector.broadcast %31 : i32 to vector<128x1xi32>
    %50 = arith.cmpi slt, %48, %49 : vector<128x1xi32>
    %51 = tpu.iota {dimensions = array<i32: 1>} : vector<1x128xi32>
    %52 = vector.broadcast %31 : i32 to vector<1x128xi32>
    %53 = arith.cmpi slt, %51, %52 : vector<1x128xi32>
    %54 = vector.broadcast %50 : vector<128x1xi1> to vector<128x128xi1>
    %55 = vector.broadcast %53 : vector<1x128xi1> to vector<128x128xi1>
    %56 = arith.andi %54, %55 : vector<128x128xi1>
    %cst_17 = arith.constant 0x7F800000 : f32
    %57 = vector.broadcast %cst_17 : f32 to vector<128x128xf32>
    %58 = arith.select %56, %47, %57 : vector<128x128xi1>, vector<128x128xf32>
    %c1_18 = arith.constant 1 : index
    %c0_19 = arith.constant 0 : index
    %c0_20 = arith.constant 0 : index
    %59 = vector.load %arg3[%c1_18, %c0_19, %c0_20] : memref<3x128x128xf32, #tpu.memory_space<vmem>>, vector<1x128x128xf32>
    %60 = vector.shape_cast %59 : vector<1x128x128xf32> to vector<128x128xf32>
    %61 = vector.shape_cast %58 : vector<128x128xf32> to vector<1x128x128xf32>
    tpu.vector_store %arg3[%c1_18, %c0_19, %c0_20], %61 {strides = array<i32>} : memref<3x128x128xf32, #tpu.memory_space<vmem>>, vector<1x128x128xf32>,
    %c2 = arith.constant 2 : index
    %62 = memref.load %arg1[%c2] : memref<3xi32, #tpu.memory_space<smem>>
    %c2_21 = arith.constant 2 : index
    %c0_22 = arith.constant 0 : index
    %c0_23 = arith.constant 0 : index
    %63 = vector.load %arg2[%c2_21, %c0_22, %c0_23] : memref<3x128x32xf32, #tpu.memory_space<vmem>>, vector<1x128x32xf32>
    %64 = vector.shape_cast %63 : vector<1x128x32xf32> to vector<128x32xf32>
    %cst_24 = arith.constant dense<0.000000e+00> : vector<128x128xf32>
    %65 = tpu.matmul %64, %64, %cst_24 {dimension_numbers = #tpu.dot_dimension_numbers<[1], [1], [0], [0], [0, 0, 1, 0], [], []>} : vector<128x32xf32>, vector<128x32xf32>, vector<128x128xf32> -> vector<128x128xf32>
    %66 = arith.mulf %64, %64 : vector<128x32xf32>
    %cst_25 = arith.constant dense<0.000000e+00> : vector<128xf32>
    %67 = vector.multi_reduction <add>, %66, %cst_25 [1] : vector<128x32xf32> to vector<128xf32>
    %68 = vector.shape_cast %67 : vector<128xf32> to vector<128x1xf32>
    %69 = tpu.transpose %68, [1, 0] : vector<128x1xf32> -> vector<1x128xf32>
    %70 = vector.broadcast %68 : vector<128x1xf32> to vector<128x128xf32>
    %71 = vector.broadcast %69 : vector<1x128xf32> to vector<128x128xf32>
    %72 = arith.addf %70, %71 : vector<128x128xf32>
    %cst_26 = arith.constant 2.000000e+00 : f32
    %73 = vector.broadcast %cst_26 : f32 to vector<128x128xf32>
    %74 = arith.mulf %73, %65 : vector<128x128xf32>
    %75 = arith.subf %72, %74 : vector<128x128xf32>
    %cst_27 = arith.constant 0.000000e+00 : f32
    %76 = vector.broadcast %cst_27 : f32 to vector<128x128xf32>
    %77 = arith.maximumf %75, %76 : vector<128x128xf32>
    %78 = math.sqrt %77 : vector<128x128xf32>
    %79 = tpu.iota {dimensions = array<i32: 0>} : vector<128x1xi32>
    %80 = vector.broadcast %62 : i32 to vector<128x1xi32>
    %81 = arith.cmpi slt, %79, %80 : vector<128x1xi32>
    %82 = tpu.iota {dimensions = array<i32: 1>} : vector<1x128xi32>
    %83 = vector.broadcast %62 : i32 to vector<1x128xi32>
    %84 = arith.cmpi slt, %82, %83 : vector<1x128xi32>
    %85 = vector.broadcast %81 : vector<128x1xi1> to vector<128x128xi1>
    %86 = vector.broadcast %84 : vector<1x128xi1> to vector<128x128xi1>
    %87 = arith.andi %85, %86 : vector<128x128xi1>
    %cst_28 = arith.constant 0x7F800000 : f32
    %88 = vector.broadcast %cst_28 : f32 to vector<128x128xf32>
    %89 = arith.select %87, %78, %88 : vector<128x128xi1>, vector<128x128xf32>
    %c2_29 = arith.constant 2 : index
    %c0_30 = arith.constant 0 : index
    %c0_31 = arith.constant 0 : index
    %90 = vector.load %arg3[%c2_29, %c0_30, %c0_31] : memref<3x128x128xf32, #tpu.memory_space<vmem>>, vector<1x128x128xf32>
    %91 = vector.shape_cast %90 : vector<1x128x128xf32> to vector<128x128xf32>
    %92 = vector.shape_cast %89 : vector<128x128xf32> to vector<1x128x128xf32>
    tpu.vector_store %arg3[%c2_29, %c0_30, %c0_31], %92 {strides = array<i32>} : memref<3x128x128xf32, #tpu.memory_space<vmem>>, vector<1x128x128xf32>,
    return
  }
  func.func @transform_0(%arg0: i32, %arg1: memref<3xi32, #tpu.memory_space<smem>>) -> (i32, i32, i32) {
    %c0_i32 = arith.constant 0 : i32
    %c0_i32_0 = arith.constant 0 : i32
    %c0_i32_1 = arith.constant 0 : i32
    %c0_i32_2 = arith.constant 0 : i32
    return %c0_i32, %c0_i32_0, %c0_i32_1 : i32, i32, i32
  }
  func.func @transform_1(%arg0: i32, %arg1: memref<3xi32, #tpu.memory_space<smem>>) -> (i32, i32, i32) {
    %c0_i32 = arith.constant 0 : i32
    %c0_i32_0 = arith.constant 0 : i32
    %c0_i32_1 = arith.constant 0 : i32
    %c0_i32_2 = arith.constant 0 : i32
    return %c0_i32, %c0_i32_0, %c0_i32_1 : i32, i32, i32
  }
}

</mosaic_0001>

<llo_original>
// kernel: topological_persistence_loss.1
$region0: #{topological_persistence_loss.1}
  #allocation0 [shape = 'u32[]', space=smem, size = 0x4, offset = 0x4, fixed_abs, tag = 'smem constant byte address 0x4 - core index']
  #allocation1 [shape = 'u32[144,128]{1,0:T(1,128)}', space=vmem, size = 0x12000, scoped, tag = 'internal scratch']
  #allocation2 [shape = 's32[1]{0}', space=sflag, size = 0x4, scoped, tag = 'scoped memory for topological_persistence_loss.1']
  #allocation3 [shape = 'u8[512]{0}', space=smem, size = 0x200, scoped, tag = 'prefetched SMEM operand 0']
  %s0 = inlined_call_operand.vmem [shape: s32[3], index: 0, kind: input, shape index: {}]
  %s1 = inlined_call_operand.vmem [shape: f32[3,128,32], index: 1, kind: input, shape index: {}]
  %s2 = inlined_call_operand.hbm [shape: f32[3,128,128], index: 2, kind: output, shape index: {}]
  %s3 = sld [smem:[#allocation0]]
  $region14: #{topological_persistence_loss.1} parent=0
    _
  %s5 = ssub.s32 1, %s3
  %s6 = scalar_select 0, %s5, %s3
  %s7 = sshll.u32 %s0, 4
  %s8 = int_to_ptr.vmem [resolvable:$true] %s7
  %10 = dma.vmem_to_smem %s8, 16, [#allocation3], [#allocation2]
  %11 = dma.done [#allocation2], 16
  %12 = sfence
  $region1: #{topological_persistence_loss.1} parent=0
    #allocation4 [shape = 'u8[196608]{0}', space=vmem, size = 0x30000, scoped, tag = 'output window, operand 0, single buffered']
    #allocation5 [shape = 's32[1]{0}', space=sflag, size = 0x4, scoped, tag = 'scoped memory for topological_persistence_loss.1']
    %13 = vsyncpa [#allocation5], 0
    // Predicated region
    $region2: #{topological_persistence_loss.1} parent=1 // pred_check
      _
    $region3: #{topological_persistence_loss.1} parent=1 // pred_check_branch
      %15 = sbr.rel (0) target = $region5
    $region4: #{topological_persistence_loss.1} parent=1 // pred_region
      _
    $region5: #{topological_persistence_loss.1} parent=1 // pred_fallthru
      _
    %s16 = sld [smem:[#allocation3]]
    %v17 = vld [vmem:[%s1] sm:$0xff]
    %v18 = vld [vmem:[%s1 + $0x8] sm:$0xff]
    %v19 = vld [vmem:[%s1 + $0x10] sm:$0xff]
    %v20 = vld [vmem:[%s1 + $0x18] sm:$0xff]
    %v21 = vld [vmem:[%s1 + $0x20] sm:$0xff]
    %v22 = vld [vmem:[%s1 + $0x28] sm:$0xff]
    %v23 = vld [vmem:[%s1 + $0x30] sm:$0xff]
    %v24 = vld [vmem:[%s1 + $0x38] sm:$0xff]
    %v25 = vld [vmem:[%s1 + $0x40] sm:$0xff]
    %v26 = vld [vmem:[%s1 + $0x48] sm:$0xff]
    %v27 = vld [vmem:[%s1 + $0x50] sm:$0xff]
    %v28 = vld [vmem:[%s1 + $0x58] sm:$0xff]
    %v29 = vld [vmem:[%s1 + $0x60] sm:$0xff]
    %v30 = vld [vmem:[%s1 + $0x68] sm:$0xff]
    %v31 = vld [vmem:[%s1 + $0x70] sm:$0xff]
    %v32 = vld [vmem:[%s1 + $0x78] sm:$0xff]
    %vm33 = vcmask 261120
    %v35 = vsel %vm33, %v17, 0
    %v38 = vsel %vm33, %v18, 0
    %v41 = vsel %vm33, %v19, 0
    %v44 = vsel %vm33, %v20, 0
    %v47 = vsel %vm33, %v21, 0
    %v50 = vsel %vm33, %v22, 0
    %v53 = vsel %vm33, %v23, 0
    %v56 = vsel %vm33, %v24, 0
    %v59 = vsel %vm33, %v25, 0
    %v62 = vsel %vm33, %v26, 0
    %v65 = vsel %vm33, %v27, 0
    %v68 = vsel %vm33, %v28, 0
    %v71 = vsel %vm33, %v29, 0
    %v74 = vsel %vm33, %v30, 0
    %v77 = vsel %vm33, %v31, 0
    %v80 = vsel %vm33, %v32, 0
    %82 = vmatprep.subr.mxu0 0.0
    %83 = vmatpush1.xpose.msra.mxu0 %v35
    %84 = vmatprep.subr.mxu0 0.0
    %85 = vmatpush1.xpose.msra.mxu0 %v38
    %86 = vmatprep.subr.mxu0 0.0
    %87 = vmatpush1.xpose.msra.mxu0 %v41
    %88 = vmatprep.subr.mxu0 0.0
    %89 = vmatpush1.xpose.msra.mxu0 %v44
    %90 = vmatprep.subr.mxu0 0.0
    %91 = vmatpush1.xpose.msra.mxu0 %v47
    %92 = vmatprep.subr.mxu0 0.0
    %93 = vmatpush1.xpose.msra.mxu0 %v50
    %94 = vmatprep.subr.mxu0 0.0
    %95 = vmatpush1.xpose.msra.mxu0 %v53
    %96 = vmatprep.subr.mxu0 0.0
    %97 = vmatpush1.xpose.msra.mxu0 %v56
    %98 = vmatprep.subr.mxu0 0.0
    %99 = vmatpush1.xpose.msra.mxu0 %v59
    %100 = vmatprep.subr.mxu0 0.0
    %101 = vmatpush1.xpose.msra.mxu0 %v62
    %102 = vmatprep.subr.mxu0 0.0
    %103 = vmatpush1.xpose.msra.mxu0 %v65
    %104 = vmatprep.subr.mxu0 0.0
    %105 = vmatpush1.xpose.msra.mxu0 %v68
    %106 = vmatprep.subr.mxu0 0.0
    %107 = vmatpush1.xpose.msra.mxu0 %v71
    %108 = vmatprep.subr.mxu0 0.0
    %109 = vmatpush1.xpose.msra.mxu0 %v74
    %110 = vmatprep.subr.mxu0 0.0
    %111 = vmatpush1.xpose.msra.mxu0 %v77
    %112 = vmatprep.subr.mxu0 0.0
    %113 = vmatpush1.xpose.msra.mxu0 %v80
    %114 = vmatprep.subr.mxu0 0.0
    %115 = vmatpush1.xpose.msra.mxu0 0.0
    %116 = vmatprep.subr.mxu0 0.0
    %117 = vmatpush1.xpose.msra.mxu0 0.0
    %118 = vmatprep.subr.mxu0 0.0
    %119 = vmatpush1.xpose.msra.mxu0 0.0
    %120 = vmatprep.subr.mxu0 0.0
    %121 = vmatpush1.xpose.msra.mxu0 0.0
    %122 = vmatprep.subr.mxu0 0.0
    %123 = vmatpush1.xpose.msra.mxu0 0.0
    %124 = vmatprep.subr.mxu0 0.0
    %125 = vmatpush1.xpose.msra.mxu0 0.0
    %126 = vmatprep.subr.mxu0 0.0
    %127 = vmatpush1.xpose.msra.mxu0 0.0
    %128 = vmatprep.subr.mxu0 0.0
    %129 = vmatpush1.xpose.msra.mxu0 0.0
    %130 = vmatprep.subr.mxu0 0.0
    %131 = vmatpush1.xpose.msra.mxu0 0.0
    %132 = vmatprep.subr.mxu0 0.0
    %133 = vmatpush1.xpose.msra.mxu0 0.0
    %134 = vmatprep.subr.mxu0 0.0
    %135 = vmatpush1.xpose.msra.mxu0 0.0
    %136 = vmatprep.subr.mxu0 0.0
    %137 = vmatpush1.xpose.msra.mxu0 0.0
    %138 = vmatprep.subr.mxu0 0.0
    %139 = vmatpush1.xpose.msra.mxu0 0.0
    %140 = vmatprep.subr.mxu0 0.0
    %141 = vmatpush1.xpose.msra.mxu0 0.0
    %142 = vmatprep.subr.mxu0 0.0
    %143 = vmatpush1.xpose.msra.mxu0 0.0
    %144 = vmatprep.subr.mxu0 0.0
    %145 = vmatpush1.xpose.msra.mxu0 0.0
    %146 = vmatprep.mubr.f32.mxu0 0.0
    %147 = vmatmul.mubr.f32.gmra.mrb[0].mxu0 %v35
    %v148 = vpop.f32.mrb[0].mxu0
    %v149 = vadd.f32 0.0, %v148
    %v150 = vpop.f32.mrb[0].mxu0
    %151 = vmatprep.mubr.f32.mxu0 0.0
    %152 = vmatmul.mubr.f32.gmra.mrb[0].mxu0 %v38
    %v153 = vpop.f32.mrb[0].mxu0
    %v154 = vadd.f32 0.0, %v153
    %v155 = vpop.f32.mrb[0].mxu0
    %156 = vmatprep.mubr.f32.mxu0 0.0
    %157 = vmatmul.mubr.f32.gmra.mrb[0].mxu0 %v41
    %v158 = vpop.f32.mrb[0].mxu0
    %v159 = vadd.f32 0.0, %v158
    %v160 = vpop.f32.mrb[0].mxu0
    %161 = vmatprep.mubr.f32.mxu0 0.0
    %162 = vmatmul.mubr.f32.gmra.mrb[0].mxu0 %v44
    %v163 = vpop.f32.mrb[0].mxu0
    %v164 = vadd.f32 0.0, %v163
    %v165 = vpop.f32.mrb[0].mxu0
    %166 = vmatprep.mubr.f32.mxu0 0.0
    %167 = vmatmul.mubr.f32.gmra.mrb[0].mxu0 %v47
    %v168 = vpop.f32.mrb[0].mxu0
    %v169 = vadd.f32 0.0, %v168
    %v170 = vpop.f32.mrb[0].mxu0
    %171 = vmatprep.mubr.f32.mxu0 0.0
    %172 = vmatmul.mubr.f32.gmra.mrb[0].mxu0 %v50
    %v173 = vpop.f32.mrb[0].mxu0
    %v174 = vadd.f32 0.0, %v173
    %v175 = vpop.f32.mrb[0].mxu0
    %176 = vmatprep.mubr.f32.mxu0 0.0
    %177 = vmatmul.mubr.f32.gmra.mrb[0].mxu0 %v53
    %v178 = vpop.f32.mrb[0].mxu0
    %v179 = vadd.f32 0.0, %v178
    %v180 = vpop.f32.mrb[0].mxu0
    %181 = vmatprep.mubr.f32.mxu0 0.0
    %182 = vmatmul.mubr.f32.gmra.mrb[0].mxu0 %v56
    %v183 = vpop.f32.mrb[0].mxu0
    %v184 = vadd.f32 0.0, %v183
    %v185 = vpop.f32.mrb[0].mxu0
    %186 = vmatprep.mubr.f32.mxu0 0.0
    %187 = vmatmul.mubr.f32.gmra.mrb[0].mxu0 %v59
    %v188 = vpop.f32.mrb[0].mxu0
    %v189 = vadd.f32 0.0, %v188
    %v190 = vpop.f32.mrb[0].mxu0
    %191 = vmatprep.mubr.f32.mxu0 0.0
    %192 = vmatmul.mubr.f32.gmra.mrb[0].mxu0 %v62
    %v193 = vpop.f32.mrb[0].mxu0
    %v194 = vadd.f32 0.0, %v193
    %v195 = vpop.f32.mrb[0].mxu0
    %196 = vmatprep.mubr.f32.mxu0 0.0
    %197 = vmatmul.mubr.f32.gmra.mrb[0].mxu0 %v65
    %v198 = vpop.f32.mrb[0].mxu0
    %v199 = vadd.f32 0.0, %v198
    %v200 = vpop.f32.mrb[0].mxu0
    %201 = vmatprep.mubr.f32.mxu0 0.0
    %202 = vmatmul.mubr.f32.gmra.mrb[0].mxu0 %v68
    %v203 = vpop.f32.mrb[0].mxu0
    %v204 = vadd.f32 0.0, %v203
    %v205 = vpop.f32.mrb[0].mxu0
    %206 = vmatprep.mubr.f32.mxu0 0.0
    %207 = vmatmul.mubr.f32.gmra.mrb[0].mxu0 %v71
    %v208 = vpop.f32.mrb[0].mxu0
    %v209 = vadd.f32 0.0, %v208
    %v210 = vpop.f32.mrb[0].mxu0
    %211 = vmatprep.mubr.f32.mxu0 0.0
    %212 = vmatmul.mubr.f32.gmra.mrb[0].mxu0 %v74
    %v213 = vpop.f32.mrb[0].mxu0
    %v214 = vadd.f32 0.0, %v213
    %v215 = vpop.f32.mrb[0].mxu0
    %216 = vmatprep.mubr.f32.mxu0 0.0
    %217 = vmatmul.mubr.f32.gmra.mrb[0].mxu0 %v77
    %v218 = vpop.f32.mrb[0].mxu0
    %v219 = vadd.f32 0.0, %v218
    %v220 = vpop.f32.mrb[0].mxu0
    %221 = vmatprep.mubr.f32.mxu0 0.0
    %222 = vmatmul.mubr.f32.gmra.mrb[0].mxu0 %v80
    %v223 = vpop.f32.mrb[0].mxu0
    %v224 = vadd.f32 0.0, %v223
    %v225 = vpop.f32.mrb[0].mxu0
    %226 = vdwg.mxu0
    %v227 = vmul.f32 %v17, %v17
    %v228 = vmul.f32 %v18, %v18
    %v229 = vmul.f32 %v19, %v19
    %v230 = vmul.f32 %v20, %v20
    %v231 = vmul.f32 %v21, %v21
    %v232 = vmul.f32 %v22, %v22
    %v233 = vmul.f32 %v23, %v23
    %v234 = vmul.f32 %v24, %v24
    %v235 = vmul.f32 %v25, %v25
    %v236 = vmul.f32 %v26, %v26
    %v237 = vmul.f32 %v27, %v27
    %v238 = vmul.f32 %v28, %v28
    %v239 = vmul.f32 %v29, %v29
    %v240 = vmul.f32 %v30, %v30
    %v241 = vmul.f32 %v31, %v31
    %v242 = vmul.f32 %v32, %v32
    %v243 = vsel %vm33, %v227, 0.0
    %244 = vadd.xlane.f32.xlu0 %v243
    %v245 = vpop.xlane.xlu0 %244
    %v246 = vsel %vm33, %v228, 0.0
    %247 = vadd.xlane.f32.xlu0 %v246
    %v248 = vpop.xlane.xlu0 %247
    %v249 = vsel %vm33, %v229, 0.0
    %250 = vadd.xlane.f32.xlu0 %v249
    %v251 = vpop.xlane.xlu0 %250
    %v252 = vsel %vm33, %v230, 0.0
    %253 = vadd.xlane.f32.xlu0 %v252
    %v254 = vpop.xlane.xlu0 %253
    %v255 = vsel %vm33, %v231, 0.0
    %256 = vadd.xlane.f32.xlu0 %v255
    %v257 = vpop.xlane.xlu0 %256
    %v258 = vsel %vm33, %v232, 0.0
    %259 = vadd.xlane.f32.xlu0 %v258
    %v260 = vpop.xlane.xlu0 %259
    %v261 = vsel %vm33, %v233, 0.0
    %262 = vadd.xlane.f32.xlu0 %v261
    %v263 = vpop.xlane.xlu0 %262
    %v264 = vsel %vm33, %v234, 0.0
    %265 = vadd.xlane.f32.xlu0 %v264
    %v266 = vpop.xlane.xlu0 %265
    %v267 = vsel %vm33, %v235, 0.0
    %268 = vadd.xlane.f32.xlu0 %v267
    %v269 = vpop.xlane.xlu0 %268
    %v270 = vsel %vm33, %v236, 0.0
    %271 = vadd.xlane.f32.xlu0 %v270
    %v272 = vpop.xlane.xlu0 %271
    %v273 = vsel %vm33, %v237, 0.0
    %274 = vadd.xlane.f32.xlu0 %v273
    %v275 = vpop.xlane.xlu0 %274
    %v276 = vsel %vm33, %v238, 0.0
    %277 = vadd.xlane.f32.xlu0 %v276
    %v278 = vpop.xlane.xlu0 %277
    %v279 = vsel %vm33, %v239, 0.0
    %280 = vadd.xlane.f32.xlu0 %v279
    %v281 = vpop.xlane.xlu0 %280
    %v282 = vsel %vm33, %v240, 0.0
    %283 = vadd.xlane.f32.xlu0 %v282
    %v284 = vpop.xlane.xlu0 %283
    %v285 = vsel %vm33, %v241, 0.0
    %286 = vadd.xlane.f32.xlu0 %v285
    %v287 = vpop.xlane.xlu0 %286
    %v288 = vsel %vm33, %v242, 0.0
    %289 = vadd.xlane.f32.xlu0 %v288
    %v290 = vpop.xlane.xlu0 %289
    %291 = vxpose.xlu0.b32.start [1/16] %v245, 128
    %292 = vxpose.xlu0.b32.cont [2/16] %v248, 128
    %293 = vxpose.xlu0.b32.cont [3/16] %v251, 128
    %294 = vxpose.xlu0.b32.cont [4/16] %v254, 128
    %295 = vxpose.xlu0.b32.cont [5/16] %v257, 128
    %296 = vxpose.xlu0.b32.cont [6/16] %v260, 128
    %297 = vxpose.xlu0.b32.cont [7/16] %v263, 128
    %298 = vxpose.xlu0.b32.cont [8/16] %v266, 128
    %299 = vxpose.xlu0.b32.cont [9/16] %v269, 128
    %300 = vxpose.xlu0.b32.cont [10/16] %v272, 128
    %301 = vxpose.xlu0.b32.cont [11/16] %v275, 128
    %302 = vxpose.xlu0.b32.cont [12/16] %v278, 128
    %303 = vxpose.xlu0.b32.cont [13/16] %v281, 128
    %304 = vxpose.xlu0.b32.cont [14/16] %v284, 128
    %305 = vxpose.xlu0.b32.cont [15/16] %v287, 128
    %306 = vxpose.xlu0.b32.end [16/16] %v290, 128
    %v307 = vpop.trf.xlu0
    %v308 = vpop.trf.xlu0
    %v309 = vpop.trf.xlu0
    %v310 = vpop.trf.xlu0
    %v311 = vpop.trf.xlu0
    %v312 = vpop.trf.xlu0
    %v313 = vpop.trf.xlu0
    %v314 = vpop.trf.xlu0
    %v315 = vpop.trf.xlu0
    %v316 = vpop.trf.xlu0
    %v317 = vpop.trf.xlu0
    %v318 = vpop.trf.xlu0
    %v319 = vpop.trf.xlu0
    %v320 = vpop.trf.xlu0
    %v321 = vpop.trf.xlu0
    %v322 = vpop.trf.xlu0
    %v323 = vlaneseq
    %v324 = vshrl.u32 %v323, 7
    %v325 = vsub.s32 0, %v324
    %v326 = vrot.slane %v307, %v325
    %v327 = vadd.f32 %v245, %v326
    %v328 = vadd.f32 %v248, %v326
    %v329 = vadd.f32 %v251, %v326
    %v330 = vadd.f32 %v254, %v326
    %v331 = vadd.f32 %v257, %v326
    %v332 = vadd.f32 %v260, %v326
    %v333 = vadd.f32 %v263, %v326
    %v334 = vadd.f32 %v266, %v326
    %v335 = vadd.f32 %v269, %v326
    %v336 = vadd.f32 %v272, %v326
    %v337 = vadd.f32 %v275, %v326
    %v338 = vadd.f32 %v278, %v326
    %v339 = vadd.f32 %v281, %v326
    %v340 = vadd.f32 %v284, %v326
    %v341 = vadd.f32 %v287, %v326
    %v342 = vadd.f32 %v290, %v326
    %v343 = vmul.f32 %v149, 2.0
    %v344 = vmul.f32 %v154, 2.0
    %v345 = vmul.f32 %v159, 2.0
    %v346 = vmul.f32 %v164, 2.0
    %v347 = vmul.f32 %v169, 2.0
    %v348 = vmul.f32 %v174, 2.0
    %v349 = vmul.f32 %v179, 2.0
    %v350 = vmul.f32 %v184, 2.0
    %v351 = vmul.f32 %v189, 2.0
    %v352 = vmul.f32 %v194, 2.0
    %v353 = vmul.f32 %v199, 2.0
    %v354 = vmul.f32 %v204, 2.0
    %v355 = vmul.f32 %v209, 2.0
    %v356 = vmul.f32 %v214, 2.0
    %v357 = vmul.f32 %v219, 2.0
    %v358 = vmul.f32 %v224, 2.0
    %v359 = vsub.f32 %v327, %v343
    %v360 = vsub.f32 %v328, %v344
    %v361 = vsub.f32 %v329, %v345
    %v362 = vsub.f32 %v330, %v346
    %v363 = vsub.f32 %v331, %v347
    %v364 = vsub.f32 %v332, %v348
    %v365 = vsub.f32 %v333, %v349
    %v366 = vsub.f32 %v334, %v350
    %v367 = vsub.f32 %v335, %v351
    %v368 = vsub.f32 %v336, %v352
    %v369 = vsub.f32 %v337, %v353
    %v370 = vsub.f32 %v338, %v354
    %v371 = vsub.f32 %v339, %v355
    %v372 = vsub.f32 %v340, %v356
    %v373 = vsub.f32 %v341, %v357
    %v374 = vsub.f32 %v342, %v358
    %v375 = vmax.f32 %v359, 0.0
    %v376 = vmax.f32 %v360, 0.0
    %v377 = vmax.f32 %v361, 0.0
    %v378 = vmax.f32 %v362, 0.0
    %v379 = vmax.f32 %v363, 0.0
    %v380 = vmax.f32 %v364, 0.0
    %v381 = vmax.f32 %v365, 0.0
    %v382 = vmax.f32 %v366, 0.0
    %v383 = vmax.f32 %v367, 0.0
    %v384 = vmax.f32 %v368, 0.0
    %v385 = vmax.f32 %v369, 0.0
    %v386 = vmax.f32 %v370, 0.0
    %v387 = vmax.f32 %v371, 0.0
    %v388 = vmax.f32 %v372, 0.0
    %v389 = vmax.f32 %v373, 0.0
    %v390 = vmax.f32 %v374, 0.0
    %v391 = vrsqrt.pop %v375
    %v392 = vmul.f32 %v375, %v391
    %vm393 = vcmp.eq.f32.partialorder %v375, inf
    %v394 = vsel %vm393, %v375, %v392
    %vm395 = vcmp.eq.f32.partialorder %v375, 0.0
    %v396 = vand.u32 %v375, 2147483648
    %v397 = vsel %vm395, %v396, %v394
    %v398 = vrsqrt.pop %v376
    %v399 = vmul.f32 %v376, %v398
    %vm400 = vcmp.eq.f32.partialorder %v376, inf
    %v401 = vsel %vm400, %v376, %v399
    %vm402 = vcmp.eq.f32.partialorder %v376, 0.0
    %v403 = vand.u32 %v376, 2147483648
    %v404 = vsel %vm402, %v403, %v401
    %v405 = vrsqrt.pop %v377
    %v406 = vmul.f32 %v377, %v405
    %vm407 = vcmp.eq.f32.partialorder %v377, inf
    %v408 = vsel %vm407, %v377, %v406
    %vm409 = vcmp.eq.f32.partialorder %v377, 0.0
    %v410 = vand.u32 %v377, 2147483648
    %v411 = vsel %vm409, %v410, %v408
    %v412 = vrsqrt.pop %v378
    %v413 = vmul.f32 %v378, %v412
    %vm414 = vcmp.eq.f32.partialorder %v378, inf
    %v415 = vsel %vm414, %v378, %v413
    %vm416 = vcmp.eq.f32.partialorder %v378, 0.0
    %v417 = vand.u32 %v378, 2147483648
    %v418 = vsel %vm416, %v417, %v415
    %v419 = vrsqrt.pop %v379
    %v420 = vmul.f32 %v379, %v419
    %vm421 = vcmp.eq.f32.partialorder %v379, inf
    %v422 = vsel %vm421, %v379, %v420
    %vm423 = vcmp.eq.f32.partialorder %v379, 0.0
    %v424 = vand.u32 %v379, 2147483648
    %v425 = vsel %vm423, %v424, %v422
    %v426 = vrsqrt.pop %v380
    %v427 = vmul.f32 %v380, %v426
    %vm428 = vcmp.eq.f32.partialorder %v380, inf
    %v429 = vsel %vm428, %v380, %v427
    %vm430 = vcmp.eq.f32.partialorder %v380, 0.0
    %v431 = vand.u32 %v380, 2147483648
    %v432 = vsel %vm430, %v431, %v429
    %v433 = vrsqrt.pop %v381
    %v434 = vmul.f32 %v381, %v433
    %vm435 = vcmp.eq.f32.partialorder %v381, inf
    %v436 = vsel %vm435, %v381, %v434
    %vm437 = vcmp.eq.f32.partialorder %v381, 0.0
    %v438 = vand.u32 %v381, 2147483648
    %v439 = vsel %vm437, %v438, %v436
    %v440 = vrsqrt.pop %v382
    %v441 = vmul.f32 %v382, %v440
    %vm442 = vcmp.eq.f32.partialorder %v382, inf
    %v443 = vsel %vm442, %v382, %v441
    %vm444 = vcmp.eq.f32.partialorder %v382, 0.0
    %v445 = vand.u32 %v382, 2147483648
    %v446 = vsel %vm444, %v445, %v443
    %v447 = vrsqrt.pop %v383
    %v448 = vmul.f32 %v383, %v447
    %vm449 = vcmp.eq.f32.partialorder %v383, inf
    %v450 = vsel %vm449, %v383, %v448
    %vm451 = vcmp.eq.f32.partialorder %v383, 0.0
    %v452 = vand.u32 %v383, 2147483648
    %v453 = vsel %vm451, %v452, %v450
    %v454 = vrsqrt.pop %v384
    %v455 = vmul.f32 %v384, %v454
    %vm456 = vcmp.eq.f32.partialorder %v384, inf
    %v457 = vsel %vm456, %v384, %v455
    %vm458 = vcmp.eq.f32.partialorder %v384, 0.0
    %v459 = vand.u32 %v384, 2147483648
    %v460 = vsel %vm458, %v459, %v457
    %v461 = vrsqrt.pop %v385
    %v462 = vmul.f32 %v385, %v461
    %vm463 = vcmp.eq.f32.partialorder %v385, inf
    %v464 = vsel %vm463, %v385, %v462
    %vm465 = vcmp.eq.f32.partialorder %v385, 0.0
    %v466 = vand.u32 %v385, 2147483648
    %v467 = vsel %vm465, %v466, %v464
    %v468 = vrsqrt.pop %v386
    %v469 = vmul.f32 %v386, %v468
    %vm470 = vcmp.eq.f32.partialorder %v386, inf
    %v471 = vsel %vm470, %v386, %v469
    %vm472 = vcmp.eq.f32.partialorder %v386, 0.0
    %v473 = vand.u32 %v386, 2147483648
    %v474 = vsel %vm472, %v473, %v471
    %v475 = vrsqrt.pop %v387
    %v476 = vmul.f32 %v387, %v475
    %vm477 = vcmp.eq.f32.partialorder %v387, inf
    %v478 = vsel %vm477, %v387, %v476
    %vm479 = vcmp.eq.f32.partialorder %v387, 0.0
    %v480 = vand.u32 %v387, 2147483648
    %v481 = vsel %vm479, %v480, %v478
    %v482 = vrsqrt.pop %v388
    %v483 = vmul.f32 %v388, %v482
    %vm484 = vcmp.eq.f32.partialorder %v388, inf
    %v485 = vsel %vm484, %v388, %v483
    %vm486 = vcmp.eq.f32.partialorder %v388, 0.0
    %v487 = vand.u32 %v388, 2147483648
    %v488 = vsel %vm486, %v487, %v485
    %v489 = vrsqrt.pop %v389
    %v490 = vmul.f32 %v389, %v489
    %vm491 = vcmp.eq.f32.partialorder %v389, inf
    %v492 = vsel %vm491, %v389, %v490
    %vm493 = vcmp.eq.f32.partialorder %v389, 0.0
    %v494 = vand.u32 %v389, 2147483648
    %v495 = vsel %vm493, %v494, %v492
    %v496 = vrsqrt.pop %v390
    %v497 = vmul.f32 %v390, %v496
    %vm498 = vcmp.eq.f32.partialorder %v390, inf
    %v499 = vsel %vm498, %v390, %v497
    %vm500 = vcmp.eq.f32.partialorder %v390, 0.0
    %v501 = vand.u32 %v390, 2147483648
    %v502 = vsel %vm500, %v501, %v499
    %v503 = vlaneseq
    %v504 = vshrl.u32 %v503, 7
    %v505 = vadd.s32 %v504, 8
    %v506 = vadd.s32 %v504, 16
    %v507 = vadd.s32 %v504, 24
    %v508 = vadd.s32 %v504, 32
    %v509 = vadd.s32 %v504, 40
    %v510 = vadd.s32 %v504, 48
    %v511 = vadd.s32 %v504, 56
    %v512 = vadd.s32 %v504, 64
    %v513 = vadd.s32 %v504, 72
    %v514 = vadd.s32 %v504, 80
    %v515 = vadd.s32 %v504, 88
    %v516 = vadd.s32 %v504, 96
    %v517 = vadd.s32 %v504, 104
    %v518 = vadd.s32 %v504, 112
    %v519 = vadd.s32 %v504, 120
    %v520 = vstv %s16
    %vm521 = vcmp.lt.s32.totalorder %v504, %v520
    %vm522 = vcmp.lt.s32.totalorder %v505, %v520
    %vm523 = vcmp.lt.s32.totalorder %v506, %v520
    %vm524 = vcmp.lt.s32.totalorder %v507, %v520
    %vm525 = vcmp.lt.s32.totalorder %v508, %v520
    %vm526 = vcmp.lt.s32.totalorder %v509, %v520
    %vm527 = vcmp.lt.s32.totalorder %v510, %v520
    %vm528 = vcmp.lt.s32.totalorder %v511, %v520
    %vm529 = vcmp.lt.s32.totalorder %v512, %v520
    %vm530 = vcmp.lt.s32.totalorder %v513, %v520
    %vm531 = vcmp.lt.s32.totalorder %v514, %v520
    %vm532 = vcmp.lt.s32.totalorder %v515, %v520
    %vm533 = vcmp.lt.s32.totalorder %v516, %v520
    %vm534 = vcmp.lt.s32.totalorder %v517, %v520
    %vm535 = vcmp.lt.s32.totalorder %v518, %v520
    %vm536 = vcmp.lt.s32.totalorder %v519, %v520
    %v537 = vlaneseq
    %v538 = vand.u32 %v537, 127
    %vm539 = vcmp.lt.s32.totalorder %v538, %v520
    %v540 = vsel %vm521, 1, 0
    %v541 = vsel %vm522, 1, 0
    %v542 = vsel %vm523, 1, 0
    %v543 = vsel %vm524, 1, 0
    %v544 = vsel %vm525, 1, 0
    %v545 = vsel %vm526, 1, 0
    %v546 = vsel %vm527, 1, 0
    %v547 = vsel %vm528, 1, 0
    %v548 = vsel %vm529, 1, 0
    %v549 = vsel %vm530, 1, 0
    %v550 = vsel %vm531, 1, 0
    %v551 = vsel %vm532, 1, 0
    %v552 = vsel %vm533, 1, 0
    %v553 = vsel %vm534, 1, 0
    %v554 = vsel %vm535, 1, 0
    %v555 = vsel %vm536, 1, 0
    %vm556 = vcmp.eq.s32.totalorder %v540, 1
    %vm557 = vcmp.eq.s32.totalorder %v541, 1
    %vm558 = vcmp.eq.s32.totalorder %v542, 1
    %vm559 = vcmp.eq.s32.totalorder %v543, 1
    %vm560 = vcmp.eq.s32.totalorder %v544, 1
    %vm561 = vcmp.eq.s32.totalorder %v545, 1
    %vm562 = vcmp.eq.s32.totalorder %v546, 1
    %vm563 = vcmp.eq.s32.totalorder %v547, 1
    %vm564 = vcmp.eq.s32.totalorder %v548, 1
    %vm565 = vcmp.eq.s32.totalorder %v549, 1
    %vm566 = vcmp.eq.s32.totalorder %v550, 1
    %vm567 = vcmp.eq.s32.totalorder %v551, 1
    %vm568 = vcmp.eq.s32.totalorder %v552, 1
    %vm569 = vcmp.eq.s32.totalorder %v553, 1
    %vm570 = vcmp.eq.s32.totalorder %v554, 1
    %vm571 = vcmp.eq.s32.totalorder %v555, 1
    %v572 = vsel %vm539, 1, 0
    %vm573 = vcmp.eq.s32.totalorder %v572, 1
    %vm574 = vmand %vm556, %vm573
    %vm575 = vmand %vm557, %vm573
    %vm576 = vmand %vm558, %vm573
    %vm577 = vmand %vm559, %vm573
    %vm578 = vmand %vm560, %vm573
    %vm579 = vmand %vm561, %vm573
    %vm580 = vmand %vm562, %vm573
    %vm581 = vmand %vm563, %vm573
    %vm582 = vmand %vm564, %vm573
    %vm583 = vmand %vm565, %vm573
    %vm584 = vmand %vm566, %vm573
    %vm585 = vmand %vm567, %vm573
    %vm586 = vmand %vm568, %vm573
    %vm587 = vmand %vm569, %vm573
    %vm588 = vmand %vm570, %vm573
    %vm589 = vmand %vm571, %vm573
    %v590 = vsel %vm574, %v397, inf
    %v591 = vsel %vm575, %v404, inf
    %v592 = vsel %vm576, %v411, inf
    %v593 = vsel %vm577, %v418, inf
    %v594 = vsel %vm578, %v425, inf
    %v595 = vsel %vm579, %v432, inf
    %v596 = vsel %vm580, %v439, inf
    %v597 = vsel %vm581, %v446, inf
    %v598 = vsel %vm582, %v453, inf
    %v599 = vsel %vm583, %v460, inf
    %v600 = vsel %vm584, %v467, inf
    %v601 = vsel %vm585, %v474, inf
    %v602 = vsel %vm586, %v481, inf
    %v603 = vsel %vm587, %v488, inf
    %v604 = vsel %vm588, %v495, inf
    %v605 = vsel %vm589, %v502, inf
    %606 = vst [vmem:[#allocation4] sm:$0xff] %v590
    %607 = vst [vmem:[#allocation4 + $0x8] sm:$0xff] %v591
    %608 = vst [vmem:[#allocation4 + $0x10] sm:$0xff] %v592
    %609 = vst [vmem:[#allocation4 + $0x18] sm:$0xff] %v593
    %610 = vst [vmem:[#allocation4 + $0x20] sm:$0xff] %v594
    %611 = vst [vmem:[#allocation4 + $0x28] sm:$0xff] %v595
    %612 = vst [vmem:[#allocation4 + $0x30] sm:$0xff] %v596
    %613 = vst [vmem:[#allocation4 + $0x38] sm:$0xff] %v597
    %614 = vst [vmem:[#allocation4 + $0x40] sm:$0xff] %v598
    %615 = vst [vmem:[#allocation4 + $0x48] sm:$0xff] %v599
    %616 = vst [vmem:[#allocation4 + $0x50] sm:$0xff] %v600
    %617 = vst [vmem:[#allocation4 + $0x58] sm:$0xff] %v601
    %618 = vst [vmem:[#allocation4 + $0x60] sm:$0xff] %v602
    %619 = vst [vmem:[#allocation4 + $0x68] sm:$0xff] %v603
    %620 = vst [vmem:[#allocation4 + $0x70] sm:$0xff] %v604
    %621 = vst [vmem:[#allocation4 + $0x78] sm:$0xff] %v605
    %s622 = sld [smem:[#allocation3 + $0x1]]
    %s623 = scalar_lea.vmem %s1, 128
    %v624 = vld [vmem:[%s623] sm:$0xff]
    %v625 = vld [vmem:[%s623 + $0x8] sm:$0xff]
    %v626 = vld [vmem:[%s623 + $0x10] sm:$0xff]
    %v627 = vld [vmem:[%s623 + $0x18] sm:$0xff]
    %v628 = vld [vmem:[%s623 + $0x20] sm:$0xff]
    %v629 = vld [vmem:[%s623 + $0x28] sm:$0xff]
    %v630 = vld [vmem:[%s623 + $0x30] sm:$0xff]
    %v631 = vld [vmem:[%s623 + $0x38] sm:$0xff]
    %v632 = vld [vmem:[%s623 + $0x40] sm:$0xff]
    %v633 = vld [vmem:[%s623 + $0x48] sm:$0xff]
    %v634 = vld [vmem:[%s623 + $0x50] sm:$0xff]
    %v635 = vld [vmem:[%s623 + $0x58] sm:$0xff]
    %v636 = vld [vmem:[%s623 + $0x60] sm:$0xff]
    %v637 = vld [vmem:[%s623 + $0x68] sm:$0xff]
    %v638 = vld [vmem:[%s623 + $0x70] sm:$0xff]
    %v639 = vld [vmem:[%s623 + $0x78] sm:$0xff]
    %v641 = vsel %vm33, %v624, 0
    %v644 = vsel %vm33, %v625, 0
    %v647 = vsel %vm33, %v626, 0
    %v650 = vsel %vm33, %v627, 0
    %v653 = vsel %vm33, %v628, 0
    %v656 = vsel %vm33, %v629, 0
    %v659 = vsel %vm33, %v630, 0
    %v662 = vsel %vm33, %v631, 0
    %v665 = vsel %vm33, %v632, 0
    %v668 = vsel %vm33, %v633, 0
    %v671 = vsel %vm33, %v634, 0
    %v674 = vsel %vm33, %v635, 0
    %v677 = vsel %vm33, %v636, 0
    %v680 = vsel %vm33, %v637, 0
    %v683 = vsel %vm33, %v638, 0
    %v686 = vsel %vm33, %v639, 0
    %688 = vmatprep.subr.mxu0 0.0
    %689 = vmatpush1.xpose.msra.mxu0 %v641
    %690 = vmatprep.subr.mxu0 0.0
    %691 = vmatpush1.xpose.msra.mxu0 %v644
    %692 = vmatprep.subr.mxu0 0.0
    %693 = vmatpush1.xpose.msra.mxu0 %v647
    %694 = vmatprep.subr.mxu0 0.0
    %695 = vmatpush1.xpose.msra.mxu0 %v650
    %696 = vmatprep.subr.mxu0 0.0
    %697 = vmatpush1.xpose.msra.mxu0 %v653
    %698 = vmatprep.subr.mxu0 0.0
    %699 = vmatpush1.xpose.msra.mxu0 %v656
    %700 = vmatprep.subr.mxu0 0.0
    %701 = vmatpush1.xpose.msra.mxu0 %v659
    %702 = vmatprep.subr.mxu0 0.0
    %703 = vmatpush1.xpose.msra.mxu0 %v662
    %704 = vmatprep.subr.mxu0 0.0
    %705 = vmatpush1.xpose.msra.mxu0 %v665
    %706 = vmatprep.subr.mxu0 0.0
    %707 = vmatpush1.xpose.msra.mxu0 %v668
    %708 = vmatprep.subr.mxu0 0.0
    %709 = vmatpush1.xpose.msra.mxu0 %v671
    %710 = vmatprep.subr.mxu0 0.0
    %711 = vmatpush1.xpose.msra.mxu0 %v674
    %712 = vmatprep.subr.mxu0 0.0
    %713 = vmatpush1.xpose.msra.mxu0 %v677
    %714 = vmatprep.subr.mxu0 0.0
    %715 = vmatpush1.xpose.msra.mxu0 %v680
    %716 = vmatprep.subr.mxu0 0.0
    %717 = vmatpush1.xpose.msra.mxu0 %v683
    %718 = vmatprep.subr.mxu0 0.0
    %719 = vmatpush1.xpose.msra.mxu0 %v686
    %720 = vmatprep.subr.mxu0 0.0
    %721 = vmatpush1.xpose.msra.mxu0 0.0
    %722 = vmatprep.subr.mxu0 0.0
    %723 = vmatpush1.xpose.msra.mxu0 0.0
    %724 = vmatprep.subr.mxu0 0.0
    %725 = vmatpush1.xpose.msra.mxu0 0.0
    %726 = vmatprep.subr.mxu0 0.0
    %727 = vmatpush1.xpose.msra.mxu0 0.0
    %728 = vmatprep.subr.mxu0 0.0
    %729 = vmatpush1.xpose.msra.mxu0 0.0
    %730 = vmatprep.subr.mxu0 0.0
    %731 = vmatpush1.xpose.msra.mxu0 0.0
    %732 = vmatprep.subr.mxu0 0.0
    %733 = vmatpush1.xpose.msra.mxu0 0.0
    %734 = vmatprep.subr.mxu0 0.0
    %735 = vmatpush1.xpose.msra.mxu0 0.0
    %736 = vmatprep.subr.mxu0 0.0
    %737 = vmatpush1.xpose.msra.mxu0 0.0
    %738 = vmatprep.subr.mxu0 0.0
    %739 = vmatpush1.xpose.msra.mxu0 0.0
    %740 = vmatprep.subr.mxu0 0.0
    %741 = vmatpush1.xpose.msra.mxu0 0.0
    %742 = vmatprep.subr.mxu0 0.0
    %743 = vmatpush1.xpose.msra.mxu0 0.0
    %744 = vmatprep.subr.mxu0 0.0
    %745 = vmatpush1.xpose.msra.mxu0 0.0
    %746 = vmatprep.subr.mxu0 0.0
    %747 = vmatpush1.xpose.msra.mxu0 0.0
    %748 = vmatprep.subr.mxu0 0.0
    %749 = vmatpush1.xpose.msra.mxu0 0.0
    %750 = vmatprep.subr.mxu0 0.0
    %751 = vmatpush1.xpose.msra.mxu0 0.0
    %752 = vmatprep.mubr.f32.mxu0 0.0
    %753 = vmatmul.mubr.f32.gmra.mrb[0].mxu0 %v641
    %v754 = vpop.f32.mrb[0].mxu0
    %v755 = vadd.f32 0.0, %v754
    %v756 = vpop.f32.mrb[0].mxu0
    %757 = vmatprep.mubr.f32.mxu0 0.0
    %758 = vmatmul.mubr.f32.gmra.mrb[0].mxu0 %v644
    %v759 = vpop.f32.mrb[0].mxu0
    %v760 = vadd.f32 0.0, %v759
    %v761 = vpop.f32.mrb[0].mxu0
    %762 = vmatprep.mubr.f32.mxu0 0.0
    %763 = vmatmul.mubr.f32.gmra.mrb[0].mxu0 %v647
    %v764 = vpop.f32.mrb[0].mxu0
    %v765 = vadd.f32 0.0, %v764
    %v766 = vpop.f32.mrb[0].mxu0
    %767 = vmatprep.mubr.f32.mxu0 0.0
    %768 = vmatmul.mubr.f32.gmra.mrb[0].mxu0 %v650
    %v769 = vpop.f32.mrb[0].mxu0
    %v770 = vadd.f32 0.0, %v769
    %v771 = vpop.f32.mrb[0].mxu0
    %772 = vmatprep.mubr.f32.mxu0 0.0
    %773 = vmatmul.mubr.f32.gmra.mrb[0].mxu0 %v653
    %v774 = vpop.f32.mrb[0].mxu0
    %v775 = vadd.f32 0.0, %v774
    %v776 = vpop.f32.mrb[0].mxu0
    %777 = vmatprep.mubr.f32.mxu0 0.0
    %778 = vmatmul.mubr.f32.gmra.mrb[0].mxu0 %v656
    %v779 = vpop.f32.mrb[0].mxu0
    %v780 = vadd.f32 0.0, %v779
    %v781 = vpop.f32.mrb[0].mxu0
    %782 = vmatprep.mubr.f32.mxu0 0.0
    %783 = vmatmul.mubr.f32.gmra.mrb[0].mxu0 %v659
    %v784 = vpop.f32.mrb[0].mxu0
    %v785 = vadd.f32 0.0, %v784
    %v786 = vpop.f32.mrb[0].mxu0
    %787 = vmatprep.mubr.f32.mxu0 0.0
    %788 = vmatmul.mubr.f32.gmra.mrb[0].mxu0 %v662
    %v789 = vpop.f32.mrb[0].mxu0
    %v790 = vadd.f32 0.0, %v789
    %v791 = vpop.f32.mrb[0].mxu0
    %792 = vmatprep.mubr.f32.mxu0 0.0
    %793 = vmatmul.mubr.f32.gmra.mrb[0].mxu0 %v665
    %v794 = vpop.f32.mrb[0].mxu0
    %v795 = vadd.f32 0.0, %v794
    %v796 = vpop.f32.mrb[0].mxu0
    %797 = vmatprep.mubr.f32.mxu0 0.0
    %798 = vmatmul.mubr.f32.gmra.mrb[0].mxu0 %v668
    %v799 = vpop.f32.mrb[0].mxu0
    %v800 = vadd.f32 0.0, %v799
    %v801 = vpop.f32.mrb[0].mxu0
    %802 = vmatprep.mubr.f32.mxu0 0.0
    %803 = vmatmul.mubr.f32.gmra.mrb[0].mxu0 %v671
    %v804 = vpop.f32.mrb[0].mxu0
    %v805 = vadd.f32 0.0, %v804
    %v806 = vpop.f32.mrb[0].mxu0
    %807 = vmatprep.mubr.f32.mxu0 0.0
    %808 = vmatmul.mubr.f32.gmra.mrb[0].mxu0 %v674
    %v809 = vpop.f32.mrb[0].mxu0
    %v810 = vadd.f32 0.0, %v809
    %v811 = vpop.f32.mrb[0].mxu0
    %812 = vmatprep.mubr.f32.mxu0 0.0
    %813 = vmatmul.mubr.f32.gmra.mrb[0].mxu0 %v677
    %v814 = vpop.f32.mrb[0].mxu0
    %v815 = vadd.f32 0.0, %v814
    %v816 = vpop.f32.mrb[0].mxu0
    %817 = vmatprep.mubr.f32.mxu0 0.0
    %818 = vmatmul.mubr.f32.gmra.mrb[0].mxu0 %v680
    %v819 = vpop.f32.mrb[0].mxu0
    %v820 = vadd.f32 0.0, %v819
    %v821 = vpop.f32.mrb[0].mxu0
    %822 = vmatprep.mubr.f32.mxu0 0.0
    %823 = vmatmul.mubr.f32.gmra.mrb[0].mxu0 %v683
    %v824 = vpop.f32.mrb[0].mxu0
    %v825 = vadd.f32 0.0, %v824
    %v826 = vpop.f32.mrb[0].mxu0
    %827 = vmatprep.mubr.f32.mxu0 0.0
    %828 = vmatmul.mubr.f32.gmra.mrb[0].mxu0 %v686
    %v829 = vpop.f32.mrb[0].mxu0
    %v830 = vadd.f32 0.0, %v829
    %v831 = vpop.f32.mrb[0].mxu0
    %832 = vdwg.mxu0
    %v833 = vmul.f32 %v624, %v624
    %v834 = vmul.f32 %v625, %v625
    %v835 = vmul.f32 %v626, %v626
    %v836 = vmul.f32 %v627, %v627
    %v837 = vmul.f32 %v628, %v628
    %v838 = vmul.f32 %v629, %v629
    %v839 = vmul.f32 %v630, %v630
    %v840 = vmul.f32 %v631, %v631
    %v841 = vmul.f32 %v632, %v632
    %v842 = vmul.f32 %v633, %v633
    %v843 = vmul.f32 %v634, %v634
    %v844 = vmul.f32 %v635, %v635
    %v845 = vmul.f32 %v636, %v636
    %v846 = vmul.f32 %v637, %v637
    %v847 = vmul.f32 %v638, %v638
    %v848 = vmul.f32 %v639, %v639
    %v849 = vsel %vm33, %v833, 0.0
    %850 = vadd.xlane.f32.xlu0 %v849
    %v851 = vpop.xlane.xlu0 %850
    %v852 = vsel %vm33, %v834, 0.0
    %853 = vadd.xlane.f32.xlu0 %v852
    %v854 = vpop.xlane.xlu0 %853
    %v855 = vsel %vm33, %v835, 0.0
    %856 = vadd.xlane.f32.xlu0 %v855
    %v857 = vpop.xlane.xlu0 %856
    %v858 = vsel %vm33, %v836, 0.0
    %859 = vadd.xlane.f32.xlu0 %v858
    %v860 = vpop.xlane.xlu0 %859
    %v861 = vsel %vm33, %v837, 0.0
    %862 = vadd.xlane.f32.xlu0 %v861
    %v863 = vpop.xlane.xlu0 %862
    %v864 = vsel %vm33, %v838, 0.0
    %865 = vadd.xlane.f32.xlu0 %v864
    %v866 = vpop.xlane.xlu0 %865
    %v867 = vsel %vm33, %v839, 0.0
    %868 = vadd.xlane.f32.xlu0 %v867
    %v869 = vpop.xlane.xlu0 %868
    %v870 = vsel %vm33, %v840, 0.0
    %871 = vadd.xlane.f32.xlu0 %v870
    %v872 = vpop.xlane.xlu0 %871
    %v873 = vsel %vm33, %v841, 0.0
    %874 = vadd.xlane.f32.xlu0 %v873
    %v875 = vpop.xlane.xlu0 %874
    %v876 = vsel %vm33, %v842, 0.0
    %877 = vadd.xlane.f32.xlu0 %v876
    %v878 = vpop.xlane.xlu0 %877
    %v879 = vsel %vm33, %v843, 0.0
    %880 = vadd.xlane.f32.xlu0 %v879
    %v881 = vpop.xlane.xlu0 %880
    %v882 = vsel %vm33, %v844, 0.0
    %883 = vadd.xlane.f32.xlu0 %v882
    %v884 = vpop.xlane.xlu0 %883
    %v885 = vsel %vm33, %v845, 0.0
    %886 = vadd.xlane.f32.xlu0 %v885
    %v887 = vpop.xlane.xlu0 %886
    %v888 = vsel %vm33, %v846, 0.0
    %889 = vadd.xlane.f32.xlu0 %v888
    %v890 = vpop.xlane.xlu0 %889
    %v891 = vsel %vm33, %v847, 0.0
    %892 = vadd.xlane.f32.xlu0 %v891
    %v893 = vpop.xlane.xlu0 %892
    %v894 = vsel %vm33, %v848, 0.0
    %895 = vadd.xlane.f32.xlu0 %v894
    %v896 = vpop.xlane.xlu0 %895
    %897 = vxpose.xlu0.b32.start [1/16] %v851, 128
    %898 = vxpose.xlu0.b32.cont [2/16] %v854, 128
    %899 = vxpose.xlu0.b32.cont [3/16] %v857, 128
    %900 = vxpose.xlu0.b32.cont [4/16] %v860, 128
    %901 = vxpose.xlu0.b32.cont [5/16] %v863, 128
    %902 = vxpose.xlu0.b32.cont [6/16] %v866, 128
    %903 = vxpose.xlu0.b32.cont [7/16] %v869, 128
    %904 = vxpose.xlu0.b32.cont [8/16] %v872, 128
    %905 = vxpose.xlu0.b32.cont [9/16] %v875, 128
    %906 = vxpose.xlu0.b32.cont [10/16] %v878, 128
    %907 = vxpose.xlu0.b32.cont [11/16] %v881, 128
    %908 = vxpose.xlu0.b32.cont [12/16] %v884, 128
    %909 = vxpose.xlu0.b32.cont [13/16] %v887, 128
    %910 = vxpose.xlu0.b32.cont [14/16] %v890, 128
    %911 = vxpose.xlu0.b32.cont [15/16] %v893, 128
    %912 = vxpose.xlu0.b32.end [16/16] %v896, 128
    %v913 = vpop.trf.xlu0
    %v914 = vpop.trf.xlu0
    %v915 = vpop.trf.xlu0
    %v916 = vpop.trf.xlu0
    %v917 = vpop.trf.xlu0
    %v918 = vpop.trf.xlu0
    %v919 = vpop.trf.xlu0
    %v920 = vpop.trf.xlu0
    %v921 = vpop.trf.xlu0
    %v922 = vpop.trf.xlu0
    %v923 = vpop.trf.xlu0
    %v924 = vpop.trf.xlu0
    %v925 = vpop.trf.xlu0
    %v926 = vpop.trf.xlu0
    %v927 = vpop.trf.xlu0
    %v928 = vpop.trf.xlu0
    %v929 = vlaneseq
    %v930 = vshrl.u32 %v929, 7
    %v931 = vsub.s32 0, %v930
    %v932 = vrot.slane %v913, %v931
    %v933 = vadd.f32 %v851, %v932
    %v934 = vadd.f32 %v854, %v932
    %v935 = vadd.f32 %v857, %v932
    %v936 = vadd.f32 %v860, %v932
    %v937 = vadd.f32 %v863, %v932
    %v938 = vadd.f32 %v866, %v932
    %v939 = vadd.f32 %v869, %v932
    %v940 = vadd.f32 %v872, %v932
    %v941 = vadd.f32 %v875, %v932
    %v942 = vadd.f32 %v878, %v932
    %v943 = vadd.f32 %v881, %v932
    %v944 = vadd.f32 %v884, %v932
    %v945 = vadd.f32 %v887, %v932
    %v946 = vadd.f32 %v890, %v932
    %v947 = vadd.f32 %v893, %v932
    %v948 = vadd.f32 %v896, %v932
    %v949 = vmul.f32 %v755, 2.0
    %v950 = vmul.f32 %v760, 2.0
    %v951 = vmul.f32 %v765, 2.0
    %v952 = vmul.f32 %v770, 2.0
    %v953 = vmul.f32 %v775, 2.0
    %v954 = vmul.f32 %v780, 2.0
    %v955 = vmul.f32 %v785, 2.0
    %v956 = vmul.f32 %v790, 2.0
    %v957 = vmul.f32 %v795, 2.0
    %v958 = vmul.f32 %v800, 2.0
    %v959 = vmul.f32 %v805, 2.0
    %v960 = vmul.f32 %v810, 2.0
    %v961 = vmul.f32 %v815, 2.0
    %v962 = vmul.f32 %v820, 2.0
    %v963 = vmul.f32 %v825, 2.0
    %v964 = vmul.f32 %v830, 2.0
    %v965 = vsub.f32 %v933, %v949
    %v966 = vsub.f32 %v934, %v950
    %v967 = vsub.f32 %v935, %v951
    %v968 = vsub.f32 %v936, %v952
    %v969 = vsub.f32 %v937, %v953
    %v970 = vsub.f32 %v938, %v954
    %v971 = vsub.f32 %v939, %v955
    %v972 = vsub.f32 %v940, %v956
    %v973 = vsub.f32 %v941, %v957
    %v974 = vsub.f32 %v942, %v958
    %v975 = vsub.f32 %v943, %v959
    %v976 = vsub.f32 %v944, %v960
    %v977 = vsub.f32 %v945, %v961
    %v978 = vsub.f32 %v946, %v962
    %v979 = vsub.f32 %v947, %v963
    %v980 = vsub.f32 %v948, %v964
    %v981 = vmax.f32 %v965, 0.0
    %v982 = vmax.f32 %v966, 0.0
    %v983 = vmax.f32 %v967, 0.0
    %v984 = vmax.f32 %v968, 0.0
    %v985 = vmax.f32 %v969, 0.0
    %v986 = vmax.f32 %v970, 0.0
    %v987 = vmax.f32 %v971, 0.0
    %v988 = vmax.f32 %v972, 0.0
    %v989 = vmax.f32 %v973, 0.0
    %v990 = vmax.f32 %v974, 0.0
    %v991 = vmax.f32 %v975, 0.0
    %v992 = vmax.f32 %v976, 0.0
    %v993 = vmax.f32 %v977, 0.0
    %v994 = vmax.f32 %v978, 0.0
    %v995 = vmax.f32 %v979, 0.0
    %v996 = vmax.f32 %v980, 0.0
    %v997 = vrsqrt.pop %v981
    %v998 = vmul.f32 %v981, %v997
    %vm999 = vcmp.eq.f32.partialorder %v981, inf
    %v1000 = vsel %vm999, %v981, %v998
    %vm1001 = vcmp.eq.f32.partialorder %v981, 0.0
    %v1002 = vand.u32 %v981, 2147483648
    %v1003 = vsel %vm1001, %v1002, %v1000
    %v1004 = vrsqrt.pop %v982
    %v1005 = vmul.f32 %v982, %v1004
    %vm1006 = vcmp.eq.f32.partialorder %v982, inf
    %v1007 = vsel %vm1006, %v982, %v1005
    %vm1008 = vcmp.eq.f32.partialorder %v982, 0.0
    %v1009 = vand.u32 %v982, 2147483648
    %v1010 = vsel %vm1008, %v1009, %v1007
    %v1011 = vrsqrt.pop %v983
    %v1012 = vmul.f32 %v983, %v1011
    %vm1013 = vcmp.eq.f32.partialorder %v983, inf
    %v1014 = vsel %vm1013, %v983, %v1012
    %vm1015 = vcmp.eq.f32.partialorder %v983, 0.0
    %v1016 = vand.u32 %v983, 2147483648
    %v1017 = vsel %vm1015, %v1016, %v1014
    %v1018 = vrsqrt.pop %v984
    %v1019 = vmul.f32 %v984, %v1018
    %vm1020 = vcmp.eq.f32.partialorder %v984, inf
    %v1021 = vsel %vm1020, %v984, %v1019
    %vm1022 = vcmp.eq.f32.partialorder %v984, 0.0
    %v1023 = vand.u32 %v984, 2147483648
    %v1024 = vsel %vm1022, %v1023, %v1021
    %v1025 = vrsqrt.pop %v985
    %v1026 = vmul.f32 %v985, %v1025
    %vm1027 = vcmp.eq.f32.partialorder %v985, inf
    %v1028 = vsel %vm1027, %v985, %v1026
    %vm1029 = vcmp.eq.f32.partialorder %v985, 0.0
    %v1030 = vand.u32 %v985, 2147483648
    %v1031 = vsel %vm1029, %v1030, %v1028
    %v1032 = vrsqrt.pop %v986
    %v1033 = vmul.f32 %v986, %v1032
    %vm1034 = vcmp.eq.f32.partialorder %v986, inf
    %v1035 = vsel %vm1034, %v986, %v1033
    %vm1036 = vcmp.eq.f32.partialorder %v986, 0.0
    %v1037 = vand.u32 %v986, 2147483648
    %v1038 = vsel %vm1036, %v1037, %v1035
    %v1039 = vrsqrt.pop %v987
    %v1040 = vmul.f32 %v987, %v1039
    %vm1041 = vcmp.eq.f32.partialorder %v987, inf
    %v1042 = vsel %vm1041, %v987, %v1040
    %vm1043 = vcmp.eq.f32.partialorder %v987, 0.0
    %v1044 = vand.u32 %v987, 2147483648
    %v1045 = vsel %vm1043, %v1044, %v1042
    %v1046 = vrsqrt.pop %v988
    %v1047 = vmul.f32 %v988, %v1046
    %vm1048 = vcmp.eq.f32.partialorder %v988, inf
    %v1049 = vsel %vm1048, %v988, %v1047
    %vm1050 = vcmp.eq.f32.partialorder %v988, 0.0
    %v1051 = vand.u32 %v988, 2147483648
    %v1052 = vsel %vm1050, %v1051, %v1049
    %v1053 = vrsqrt.pop %v989
    %v1054 = vmul.f32 %v989, %v1053
    %vm1055 = vcmp.eq.f32.partialorder %v989, inf
    %v1056 = vsel %vm1055, %v989, %v1054
    %vm1057 = vcmp.eq.f32.partialorder %v989, 0.0
    %v1058 = vand.u32 %v989, 2147483648
    %v1059 = vsel %vm1057, %v1058, %v1056
    %v1060 = vrsqrt.pop %v990
    %v1061 = vmul.f32 %v990, %v1060
    %vm1062 = vcmp.eq.f32.partialorder %v990, inf
    %v1063 = vsel %vm1062, %v990, %v1061
    %vm1064 = vcmp.eq.f32.partialorder %v990, 0.0
    %v1065 = vand.u32 %v990, 2147483648
    %v1066 = vsel %vm1064, %v1065, %v1063
    %v1067 = vrsqrt.pop %v991
    %v1068 = vmul.f32 %v991, %v1067
    %vm1069 = vcmp.eq.f32.partialorder %v991, inf
    %v1070 = vsel %vm1069, %v991, %v1068
    %vm1071 = vcmp.eq.f32.partialorder %v991, 0.0
    %v1072 = vand.u32 %v991, 2147483648
    %v1073 = vsel %vm1071, %v1072, %v1070
    %v1074 = vrsqrt.pop %v992
    %v1075 = vmul.f32 %v992, %v1074
    %vm1076 = vcmp.eq.f32.partialorder %v992, inf
    %v1077 = vsel %vm1076, %v992, %v1075
    %vm1078 = vcmp.eq.f32.partialorder %v992, 0.0
    %v1079 = vand.u32 %v992, 2147483648
    %v1080 = vsel %vm1078, %v1079, %v1077
    %v1081 = vrsqrt.pop %v993
    %v1082 = vmul.f32 %v993, %v1081
    %vm1083 = vcmp.eq.f32.partialorder %v993, inf
    %v1084 = vsel %vm1083, %v993, %v1082
    %vm1085 = vcmp.eq.f32.partialorder %v993, 0.0
    %v1086 = vand.u32 %v993, 2147483648
    %v1087 = vsel %vm1085, %v1086, %v1084
    %v1088 = vrsqrt.pop %v994
    %v1089 = vmul.f32 %v994, %v1088
    %vm1090 = vcmp.eq.f32.partialorder %v994, inf
    %v1091 = vsel %vm1090, %v994, %v1089
    %vm1092 = vcmp.eq.f32.partialorder %v994, 0.0
    %v1093 = vand.u32 %v994, 2147483648
    %v1094 = vsel %vm1092, %v1093, %v1091
    %v1095 = vrsqrt.pop %v995
    %v1096 = vmul.f32 %v995, %v1095
    %vm1097 = vcmp.eq.f32.partialorder %v995, inf
    %v1098 = vsel %vm1097, %v995, %v1096
    %vm1099 = vcmp.eq.f32.partialorder %v995, 0.0
    %v1100 = vand.u32 %v995, 2147483648
    %v1101 = vsel %vm1099, %v1100, %v1098
    %v1102 = vrsqrt.pop %v996
    %v1103 = vmul.f32 %v996, %v1102
    %vm1104 = vcmp.eq.f32.partialorder %v996, inf
    %v1105 = vsel %vm1104, %v996, %v1103
    %vm1106 = vcmp.eq.f32.partialorder %v996, 0.0
    %v1107 = vand.u32 %v996, 2147483648
    %v1108 = vsel %vm1106, %v1107, %v1105
    %v1109 = vstv %s622
    %vm1110 = vcmp.lt.s32.totalorder %v504, %v1109
    %vm1111 = vcmp.lt.s32.totalorder %v505, %v1109
    %vm1112 = vcmp.lt.s32.totalorder %v506, %v1109
    %vm1113 = vcmp.lt.s32.totalorder %v507, %v1109
    %vm1114 = vcmp.lt.s32.totalorder %v508, %v1109
    %vm1115 = vcmp.lt.s32.totalorder %v509, %v1109
    %vm1116 = vcmp.lt.s32.totalorder %v510, %v1109
    %vm1117 = vcmp.lt.s32.totalorder %v511, %v1109
    %vm1118 = vcmp.lt.s32.totalorder %v512, %v1109
    %vm1119 = vcmp.lt.s32.totalorder %v513, %v1109
    %vm1120 = vcmp.lt.s32.totalorder %v514, %v1109
    %vm1121 = vcmp.lt.s32.totalorder %v515, %v1109
    %vm1122 = vcmp.lt.s32.totalorder %v516, %v1109
    %vm1123 = vcmp.lt.s32.totalorder %v517, %v1109
    %vm1124 = vcmp.lt.s32.totalorder %v518, %v1109
    %vm1125 = vcmp.lt.s32.totalorder %v519, %v1109
    %vm1126 = vcmp.lt.s32.totalorder %v538, %v1109
    %v1127 = vsel %vm1110, 1, 0
    %v1128 = vsel %vm1111, 1, 0
    %v1129 = vsel %vm1112, 1, 0
    %v1130 = vsel %vm1113, 1, 0
    %v1131 = vsel %vm1114, 1, 0
    %v1132 = vsel %vm1115, 1, 0
    %v1133 = vsel %vm1116, 1, 0
    %v1134 = vsel %vm1117, 1, 0
    %v1135 = vsel %vm1118, 1, 0
    %v1136 = vsel %vm1119, 1, 0
    %v1137 = vsel %vm1120, 1, 0
    %v1138 = vsel %vm1121, 1, 0
    %v1139 = vsel %vm1122, 1, 0
    %v1140 = vsel %vm1123, 1, 0
    %v1141 = vsel %vm1124, 1, 0
    %v1142 = vsel %vm1125, 1, 0
    %vm1143 = vcmp.eq.s32.totalorder %v1127, 1
    %vm1144 = vcmp.eq.s32.totalorder %v1128, 1
    %vm1145 = vcmp.eq.s32.totalorder %v1129, 1
    %vm1146 = vcmp.eq.s32.totalorder %v1130, 1
    %vm1147 = vcmp.eq.s32.totalorder %v1131, 1
    %vm1148 = vcmp.eq.s32.totalorder %v1132, 1
    %vm1149 = vcmp.eq.s32.totalorder %v1133, 1
    %vm1150 = vcmp.eq.s32.totalorder %v1134, 1
    %vm1151 = vcmp.eq.s32.totalorder %v1135, 1
    %vm1152 = vcmp.eq.s32.totalorder %v1136, 1
    %vm1153 = vcmp.eq.s32.totalorder %v1137, 1
    %vm1154 = vcmp.eq.s32.totalorder %v1138, 1
    %vm1155 = vcmp.eq.s32.totalorder %v1139, 1
    %vm1156 = vcmp.eq.s32.totalorder %v1140, 1
    %vm1157 = vcmp.eq.s32.totalorder %v1141, 1
    %vm1158 = vcmp.eq.s32.totalorder %v1142, 1
    %v1159 = vsel %vm1126, 1, 0
    %vm1160 = vcmp.eq.s32.totalorder %v1159, 1
    %vm1161 = vmand %vm1143, %vm1160
    %vm1162 = vmand %vm1144, %vm1160
    %vm1163 = vmand %vm1145, %vm1160
    %vm1164 = vmand %vm1146, %vm1160
    %vm1165 = vmand %vm1147, %vm1160
    %vm1166 = vmand %vm1148, %vm1160
    %vm1167 = vmand %vm1149, %vm1160
    %vm1168 = vmand %vm1150, %vm1160
    %vm1169 = vmand %vm1151, %vm1160
    %vm1170 = vmand %vm1152, %vm1160
    %vm1171 = vmand %vm1153, %vm1160
    %vm1172 = vmand %vm1154, %vm1160
    %vm1173 = vmand %vm1155, %vm1160
    %vm1174 = vmand %vm1156, %vm1160
    %vm1175 = vmand %vm1157, %vm1160
    %vm1176 = vmand %vm1158, %vm1160
    %v1177 = vsel %vm1161, %v1003, inf
    %v1178 = vsel %vm1162, %v1010, inf
    %v1179 = vsel %vm1163, %v1017, inf
    %v1180 = vsel %vm1164, %v1024, inf
    %v1181 = vsel %vm1165, %v1031, inf
    %v1182 = vsel %vm1166, %v1038, inf
    %v1183 = vsel %vm1167, %v1045, inf
    %v1184 = vsel %vm1168, %v1052, inf
    %v1185 = vsel %vm1169, %v1059, inf
    %v1186 = vsel %vm1170, %v1066, inf
    %v1187 = vsel %vm1171, %v1073, inf
    %v1188 = vsel %vm1172, %v1080, inf
    %v1189 = vsel %vm1173, %v1087, inf
    %v1190 = vsel %vm1174, %v1094, inf
    %v1191 = vsel %vm1175, %v1101, inf
    %v1192 = vsel %vm1176, %v1108, inf
    %s1193 = scalar_lea.vmem [#allocation4], 128
    %1194 = vst [vmem:[%s1193] sm:$0xff] %v1177
    %1195 = vst [vmem:[%s1193 + $0x8] sm:$0xff] %v1178
    %1196 = vst [vmem:[%s1193 + $0x10] sm:$0xff] %v1179
    %1197 = vst [vmem:[%s1193 + $0x18] sm:$0xff] %v1180
    %1198 = vst [vmem:[%s1193 + $0x20] sm:$0xff] %v1181
    %1199 = vst [vmem:[%s1193 + $0x28] sm:$0xff] %v1182
    %1200 = vst [vmem:[%s1193 + $0x30] sm:$0xff] %v1183
    %1201 = vst [vmem:[%s1193 + $0x38] sm:$0xff] %v1184
    %1202 = vst [vmem:[%s1193 + $0x40] sm:$0xff] %v1185
    %1203 = vst [vmem:[%s1193 + $0x48] sm:$0xff] %v1186
    %1204 = vst [vmem:[%s1193 + $0x50] sm:$0xff] %v1187
    %1205 = vst [vmem:[%s1193 + $0x58] sm:$0xff] %v1188
    %1206 = vst [vmem:[%s1193 + $0x60] sm:$0xff] %v1189
    %1207 = vst [vmem:[%s1193 + $0x68] sm:$0xff] %v1190
    %1208 = vst [vmem:[%s1193 + $0x70] sm:$0xff] %v1191
    %1209 = vst [vmem:[%s1193 + $0x78] sm:$0xff] %v1192
    %s1210 = sld [smem:[#allocation3 + $0x2]]
    %s1211 = scalar_lea.vmem %s1, 256
    %v1212 = vld [vmem:[%s1211] sm:$0xff]
    %v1213 = vld [vmem:[%s1211 + $0x8] sm:$0xff]
    %v1214 = vld [vmem:[%s1211 + $0x10] sm:$0xff]
    %v1215 = vld [vmem:[%s1211 + $0x18] sm:$0xff]
    %v1216 = vld [vmem:[%s1211 + $0x20] sm:$0xff]
    %v1217 = vld [vmem:[%s1211 + $0x28] sm:$0xff]
    %v1218 = vld [vmem:[%s1211 + $0x30] sm:$0xff]
    %v1219 = vld [vmem:[%s1211 + $0x38] sm:$0xff]
    %v1220 = vld [vmem:[%s1211 + $0x40] sm:$0xff]
    %v1221 = vld [vmem:[%s1211 + $0x48] sm:$0xff]
    %v1222 = vld [vmem:[%s1211 + $0x50] sm:$0xff]
    %v1223 = vld [vmem:[%s1211 + $0x58] sm:$0xff]
    %v1224 = vld [vmem:[%s1211 + $0x60] sm:$0xff]
    %v1225 = vld [vmem:[%s1211 + $0x68] sm:$0xff]
    %v1226 = vld [vmem:[%s1211 + $0x70] sm:$0xff]
    %v1227 = vld [vmem:[%s1211 + $0x78] sm:$0xff]
    %v1229 = vsel %vm33, %v1212, 0
    %v1232 = vsel %vm33, %v1213, 0
    %v1235 = vsel %vm33, %v1214, 0
    %v1238 = vsel %vm33, %v1215, 0
    %v1241 = vsel %vm33, %v1216, 0
    %v1244 = vsel %vm33, %v1217, 0
    %v1247 = vsel %vm33, %v1218, 0
    %v1250 = vsel %vm33, %v1219, 0
    %v1253 = vsel %vm33, %v1220, 0
    %v1256 = vsel %vm33, %v1221, 0
    %v1259 = vsel %vm33, %v1222, 0
    %v1262 = vsel %vm33, %v1223, 0
    %v1265 = vsel %vm33, %v1224, 0
    %v1268 = vsel %vm33, %v1225, 0
    %v1271 = vsel %vm33, %v1226, 0
    %v1274 = vsel %vm33, %v1227, 0
    %1276 = vmatprep.subr.mxu0 0.0
    %1277 = vmatpush1.xpose.msra.mxu0 %v1229
    %1278 = vmatprep.subr.mxu0 0.0
    %1279 = vmatpush1.xpose.msra.mxu0 %v1232
    %1280 = vmatprep.subr.mxu0 0.0
    %1281 = vmatpush1.xpose.msra.mxu0 %v1235
    %1282 = vmatprep.subr.mxu0 0.0
    %1283 = vmatpush1.xpose.msra.mxu0 %v1238
    %1284 = vmatprep.subr.mxu0 0.0
    %1285 = vmatpush1.xpose.msra.mxu0 %v1241
    %1286 = vmatprep.subr.mxu0 0.0
    %1287 = vmatpush1.xpose.msra.mxu0 %v1244
    %1288 = vmatprep.subr.mxu0 0.0
    %1289 = vmatpush1.xpose.msra.mxu0 %v1247
    %1290 = vmatprep.subr.mxu0 0.0
    %1291 = vmatpush1.xpose.msra.mxu0 %v1250
    %1292 = vmatprep.subr.mxu0 0.0
    %1293 = vmatpush1.xpose.msra.mxu0 %v1253
    %1294 = vmatprep.subr.mxu0 0.0
    %1295 = vmatpush1.xpose.msra.mxu0 %v1256
    %1296 = vmatprep.subr.mxu0 0.0
    %1297 = vmatpush1.xpose.msra.mxu0 %v1259
    %1298 = vmatprep.subr.mxu0 0.0
    %1299 = vmatpush1.xpose.msra.mxu0 %v1262
    %1300 = vmatprep.subr.mxu0 0.0
    %1301 = vmatpush1.xpose.msra.mxu0 %v1265
    %1302 = vmatprep.subr.mxu0 0.0
    %1303 = vmatpush1.xpose.msra.mxu0 %v1268
    %1304 = vmatprep.subr.mxu0 0.0
    %1305 = vmatpush1.xpose.msra.mxu0 %v1271
    %1306 = vmatprep.subr.mxu0 0.0
    %1307 = vmatpush1.xpose.msra.mxu0 %v1274
    %1308 = vmatprep.subr.mxu0 0.0
    %1309 = vmatpush1.xpose.msra.mxu0 0.0
    %1310 = vmatprep.subr.mxu0 0.0
    %1311 = vmatpush1.xpose.msra.mxu0 0.0
    %1312 = vmatprep.subr.mxu0 0.0
    %1313 = vmatpush1.xpose.msra.mxu0 0.0
    %1314 = vmatprep.subr.mxu0 0.0
    %1315 = vmatpush1.xpose.msra.mxu0 0.0
    %1316 = vmatprep.subr.mxu0 0.0
    %1317 = vmatpush1.xpose.msra.mxu0 0.0
    %1318 = vmatprep.subr.mxu0 0.0
    %1319 = vmatpush1.xpose.msra.mxu0 0.0
    %1320 = vmatprep.subr.mxu0 0.0
    %1321 = vmatpush1.xpose.msra.mxu0 0.0
    %1322 = vmatprep.subr.mxu0 0.0
    %1323 = vmatpush1.xpose.msra.mxu0 0.0
    %1324 = vmatprep.subr.mxu0 0.0
    %1325 = vmatpush1.xpose.msra.mxu0 0.0
    %1326 = vmatprep.subr.mxu0 0.0
    %1327 = vmatpush1.xpose.msra.mxu0 0.0
    %1328 = vmatprep.subr.mxu0 0.0
    %1329 = vmatpush1.xpose.msra.mxu0 0.0
    %1330 = vmatprep.subr.mxu0 0.0
    %1331 = vmatpush1.xpose.msra.mxu0 0.0
    %1332 = vmatprep.subr.mxu0 0.0
    %1333 = vmatpush1.xpose.msra.mxu0 0.0
    %1334 = vmatprep.subr.mxu0 0.0
    %1335 = vmatpush1.xpose.msra.mxu0 0.0
    %1336 = vmatprep.subr.mxu0 0.0
    %1337 = vmatpush1.xpose.msra.mxu0 0.0
    %1338 = vmatprep.subr.mxu0 0.0
    %1339 = vmatpush1.xpose.msra.mxu0 0.0
    %1340 = vmatprep.mubr.f32.mxu0 0.0
    %1341 = vmatmul.mubr.f32.gmra.mrb[0].mxu0 %v1229
    %v1342 = vpop.f32.mrb[0].mxu0
    %v1343 = vadd.f32 0.0, %v1342
    %v1344 = vpop.f32.mrb[0].mxu0
    %1345 = vmatprep.mubr.f32.mxu0 0.0
    %1346 = vmatmul.mubr.f32.gmra.mrb[0].mxu0 %v1232
    %v1347 = vpop.f32.mrb[0].mxu0
    %v1348 = vadd.f32 0.0, %v1347
    %v1349 = vpop.f32.mrb[0].mxu0
    %1350 = vmatprep.mubr.f32.mxu0 0.0
    %1351 = vmatmul.mubr.f32.gmra.mrb[0].mxu0 %v1235
    %v1352 = vpop.f32.mrb[0].mxu0
    %v1353 = vadd.f32 0.0, %v1352
    %v1354 = vpop.f32.mrb[0].mxu0
    %1355 = vmatprep.mubr.f32.mxu0 0.0
    %1356 = vmatmul.mubr.f32.gmra.mrb[0].mxu0 %v1238
    %v1357 = vpop.f32.mrb[0].mxu0
    %v1358 = vadd.f32 0.0, %v1357
    %v1359 = vpop.f32.mrb[0].mxu0
    %1360 = vmatprep.mubr.f32.mxu0 0.0
    %1361 = vmatmul.mubr.f32.gmra.mrb[0].mxu0 %v1241
    %v1362 = vpop.f32.mrb[0].mxu0
    %v1363 = vadd.f32 0.0, %v1362
    %v1364 = vpop.f32.mrb[0].mxu0
    %1365 = vmatprep.mubr.f32.mxu0 0.0
    %1366 = vmatmul.mubr.f32.gmra.mrb[0].mxu0 %v1244
    %v1367 = vpop.f32.mrb[0].mxu0
    %v1368 = vadd.f32 0.0, %v1367
    %v1369 = vpop.f32.mrb[0].mxu0
    %1370 = vmatprep.mubr.f32.mxu0 0.0
    %1371 = vmatmul.mubr.f32.gmra.mrb[0].mxu0 %v1247
    %v1372 = vpop.f32.mrb[0].mxu0
    %v1373 = vadd.f32 0.0, %v1372
    %v1374 = vpop.f32.mrb[0].mxu0
    %1375 = vmatprep.mubr.f32.mxu0 0.0
    %1376 = vmatmul.mubr.f32.gmra.mrb[0].mxu0 %v1250
    %v1377 = vpop.f32.mrb[0].mxu0
    %v1378 = vadd.f32 0.0, %v1377
    %v1379 = vpop.f32.mrb[0].mxu0
    %1380 = vmatprep.mubr.f32.mxu0 0.0
    %1381 = vmatmul.mubr.f32.gmra.mrb[0].mxu0 %v1253
    %v1382 = vpop.f32.mrb[0].mxu0
    %v1383 = vadd.f32 0.0, %v1382
    %v1384 = vpop.f32.mrb[0].mxu0
    %1385 = vmatprep.mubr.f32.mxu0 0.0
    %1386 = vmatmul.mubr.f32.gmra.mrb[0].mxu0 %v1256
    %v1387 = vpop.f32.mrb[0].mxu0
    %v1388 = vadd.f32 0.0, %v1387
    %v1389 = vpop.f32.mrb[0].mxu0
    %1390 = vmatprep.mubr.f32.mxu0 0.0
    %1391 = vmatmul.mubr.f32.gmra.mrb[0].mxu0 %v1259
    %v1392 = vpop.f32.mrb[0].mxu0
    %v1393 = vadd.f32 0.0, %v1392
    %v1394 = vpop.f32.mrb[0].mxu0
    %1395 = vmatprep.mubr.f32.mxu0 0.0
    %1396 = vmatmul.mubr.f32.gmra.mrb[0].mxu0 %v1262
    %v1397 = vpop.f32.mrb[0].mxu0
    %v1398 = vadd.f32 0.0, %v1397
    %v1399 = vpop.f32.mrb[0].mxu0
    %1400 = vmatprep.mubr.f32.mxu0 0.0
    %1401 = vmatmul.mubr.f32.gmra.mrb[0].mxu0 %v1265
    %v1402 = vpop.f32.mrb[0].mxu0
    %v1403 = vadd.f32 0.0, %v1402
    %v1404 = vpop.f32.mrb[0].mxu0
    %1405 = vmatprep.mubr.f32.mxu0 0.0
    %1406 = vmatmul.mubr.f32.gmra.mrb[0].mxu0 %v1268
    %v1407 = vpop.f32.mrb[0].mxu0
    %v1408 = vadd.f32 0.0, %v1407
    %v1409 = vpop.f32.mrb[0].mxu0
    %1410 = vmatprep.mubr.f32.mxu0 0.0
    %1411 = vmatmul.mubr.f32.gmra.mrb[0].mxu0 %v1271
    %v1412 = vpop.f32.mrb[0].mxu0
    %v1413 = vadd.f32 0.0, %v1412
    %v1414 = vpop.f32.mrb[0].mxu0
    %1415 = vmatprep.mubr.f32.mxu0 0.0
    %1416 = vmatmul.mubr.f32.gmra.mrb[0].mxu0 %v1274
    %v1417 = vpop.f32.mrb[0].mxu0
    %v1418 = vadd.f32 0.0, %v1417
    %v1419 = vpop.f32.mrb[0].mxu0
    %1420 = vdwg.mxu0
    %v1421 = vmul.f32 %v1212, %v1212
    %v1422 = vmul.f32 %v1213, %v1213
    %v1423 = vmul.f32 %v1214, %v1214
    %v1424 = vmul.f32 %v1215, %v1215
    %v1425 = vmul.f32 %v1216, %v1216
    %v1426 = vmul.f32 %v1217, %v1217
    %v1427 = vmul.f32 %v1218, %v1218
    %v1428 = vmul.f32 %v1219, %v1219
    %v1429 = vmul.f32 %v1220, %v1220
    %v1430 = vmul.f32 %v1221, %v1221
    %v1431 = vmul.f32 %v1222, %v1222
    %v1432 = vmul.f32 %v1223, %v1223
    %v1433 = vmul.f32 %v1224, %v1224
    %v1434 = vmul.f32 %v1225, %v1225
    %v1435 = vmul.f32 %v1226, %v1226
    %v1436 = vmul.f32 %v1227, %v1227
    %v1437 = vsel %vm33, %v1421, 0.0
    %1438 = vadd.xlane.f32.xlu0 %v1437
    %v1439 = vpop.xlane.xlu0 %1438
    %v1440 = vsel %vm33, %v1422, 0.0
    %1441 = vadd.xlane.f32.xlu0 %v1440
    %v1442 = vpop.xlane.xlu0 %1441
    %v1443 = vsel %vm33, %v1423, 0.0
    %1444 = vadd.xlane.f32.xlu0 %v1443
    %v1445 = vpop.xlane.xlu0 %1444
    %v1446 = vsel %vm33, %v1424, 0.0
    %1447 = vadd.xlane.f32.xlu0 %v1446
    %v1448 = vpop.xlane.xlu0 %1447
    %v1449 = vsel %vm33, %v1425, 0.0
    %1450 = vadd.xlane.f32.xlu0 %v1449
    %v1451 = vpop.xlane.xlu0 %1450
    %v1452 = vsel %vm33, %v1426, 0.0
    %1453 = vadd.xlane.f32.xlu0 %v1452
    %v1454 = vpop.xlane.xlu0 %1453
    %v1455 = vsel %vm33, %v1427, 0.0
    %1456 = vadd.xlane.f32.xlu0 %v1455
    %v1457 = vpop.xlane.xlu0 %1456
    %v1458 = vsel %vm33, %v1428, 0.0
    %1459 = vadd.xlane.f32.xlu0 %v1458
    %v1460 = vpop.xlane.xlu0 %1459
    %v1461 = vsel %vm33, %v1429, 0.0
    %1462 = vadd.xlane.f32.xlu0 %v1461
    %v1463 = vpop.xlane.xlu0 %1462
    %v1464 = vsel %vm33, %v1430, 0.0
    %1465 = vadd.xlane.f32.xlu0 %v1464
    %v1466 = vpop.xlane.xlu0 %1465
    %v1467 = vsel %vm33, %v1431, 0.0
    %1468 = vadd.xlane.f32.xlu0 %v1467
    %v1469 = vpop.xlane.xlu0 %1468
    %v1470 = vsel %vm33, %v1432, 0.0
    %1471 = vadd.xlane.f32.xlu0 %v1470
    %v1472 = vpop.xlane.xlu0 %1471
    %v1473 = vsel %vm33, %v1433, 0.0
    %1474 = vadd.xlane.f32.xlu0 %v1473
    %v1475 = vpop.xlane.xlu0 %1474
    %v1476 = vsel %vm33, %v1434, 0.0
    %1477 = vadd.xlane.f32.xlu0 %v1476
    %v1478 = vpop.xlane.xlu0 %1477
    %v1479 = vsel %vm33, %v1435, 0.0
    %1480 = vadd.xlane.f32.xlu0 %v1479
    %v1481 = vpop.xlane.xlu0 %1480
    %v1482 = vsel %vm33, %v1436, 0.0
    %1483 = vadd.xlane.f32.xlu0 %v1482
    %v1484 = vpop.xlane.xlu0 %1483
    %1485 = vxpose.xlu0.b32.start [1/16] %v1439, 128
    %1486 = vxpose.xlu0.b32.cont [2/16] %v1442, 128
    %1487 = vxpose.xlu0.b32.cont [3/16] %v1445, 128
    %1488 = vxpose.xlu0.b32.cont [4/16] %v1448, 128
    %1489 = vxpose.xlu0.b32.cont [5/16] %v1451, 128
    %1490 = vxpose.xlu0.b32.cont [6/16] %v1454, 128
    %1491 = vxpose.xlu0.b32.cont [7/16] %v1457, 128
    %1492 = vxpose.xlu0.b32.cont [8/16] %v1460, 128
    %1493 = vxpose.xlu0.b32.cont [9/16] %v1463, 128
    %1494 = vxpose.xlu0.b32.cont [10/16] %v1466, 128
    %1495 = vxpose.xlu0.b32.cont [11/16] %v1469, 128
    %1496 = vxpose.xlu0.b32.cont [12/16] %v1472, 128
    %1497 = vxpose.xlu0.b32.cont [13/16] %v1475, 128
    %1498 = vxpose.xlu0.b32.cont [14/16] %v1478, 128
    %1499 = vxpose.xlu0.b32.cont [15/16] %v1481, 128
    %1500 = vxpose.xlu0.b32.end [16/16] %v1484, 128
    %v1501 = vpop.trf.xlu0
    %v1502 = vpop.trf.xlu0
    %v1503 = vpop.trf.xlu0
    %v1504 = vpop.trf.xlu0
    %v1505 = vpop.trf.xlu0
    %v1506 = vpop.trf.xlu0
    %v1507 = vpop.trf.xlu0
    %v1508 = vpop.trf.xlu0
    %v1509 = vpop.trf.xlu0
    %v1510 = vpop.trf.xlu0
    %v1511 = vpop.trf.xlu0
    %v1512 = vpop.trf.xlu0
    %v1513 = vpop.trf.xlu0
    %v1514 = vpop.trf.xlu0
    %v1515 = vpop.trf.xlu0
    %v1516 = vpop.trf.xlu0
    %v1517 = vlaneseq
    %v1518 = vshrl.u32 %v1517, 7
    %v1519 = vsub.s32 0, %v1518
    %v1520 = vrot.slane %v1501, %v1519
    %v1521 = vadd.f32 %v1439, %v1520
    %v1522 = vadd.f32 %v1442, %v1520
    %v1523 = vadd.f32 %v1445, %v1520
    %v1524 = vadd.f32 %v1448, %v1520
    %v1525 = vadd.f32 %v1451, %v1520
    %v1526 = vadd.f32 %v1454, %v1520
    %v1527 = vadd.f32 %v1457, %v1520
    %v1528 = vadd.f32 %v1460, %v1520
    %v1529 = vadd.f32 %v1463, %v1520
    %v1530 = vadd.f32 %v1466, %v1520
    %v1531 = vadd.f32 %v1469, %v1520
    %v1532 = vadd.f32 %v1472, %v1520
    %v1533 = vadd.f32 %v1475, %v1520
    %v1534 = vadd.f32 %v1478, %v1520
    %v1535 = vadd.f32 %v1481, %v1520
    %v1536 = vadd.f32 %v1484, %v1520
    %v1537 = vmul.f32 %v1343, 2.0
    %v1538 = vmul.f32 %v1348, 2.0
    %v1539 = vmul.f32 %v1353, 2.0
    %v1540 = vmul.f32 %v1358, 2.0
    %v1541 = vmul.f32 %v1363, 2.0
    %v1542 = vmul.f32 %v1368, 2.0
    %v1543 = vmul.f32 %v1373, 2.0
    %v1544 = vmul.f32 %v1378, 2.0
    %v1545 = vmul.f32 %v1383, 2.0
    %v1546 = vmul.f32 %v1388, 2.0
    %v1547 = vmul.f32 %v1393, 2.0
    %v1548 = vmul.f32 %v1398, 2.0
    %v1549 = vmul.f32 %v1403, 2.0
    %v1550 = vmul.f32 %v1408, 2.0
    %v1551 = vmul.f32 %v1413, 2.0
    %v1552 = vmul.f32 %v1418, 2.0
    %v1553 = vsub.f32 %v1521, %v1537
    %v1554 = vsub.f32 %v1522, %v1538
    %v1555 = vsub.f32 %v1523, %v1539
    %v1556 = vsub.f32 %v1524, %v1540
    %v1557 = vsub.f32 %v1525, %v1541
    %v1558 = vsub.f32 %v1526, %v1542
    %v1559 = vsub.f32 %v1527, %v1543
    %v1560 = vsub.f32 %v1528, %v1544
    %v1561 = vsub.f32 %v1529, %v1545
    %v1562 = vsub.f32 %v1530, %v1546
    %v1563 = vsub.f32 %v1531, %v1547
    %v1564 = vsub.f32 %v1532, %v1548
    %v1565 = vsub.f32 %v1533, %v1549
    %v1566 = vsub.f32 %v1534, %v1550
    %v1567 = vsub.f32 %v1535, %v1551
    %v1568 = vsub.f32 %v1536, %v1552
    %v1569 = vmax.f32 %v1553, 0.0
    %v1570 = vmax.f32 %v1554, 0.0
    %v1571 = vmax.f32 %v1555, 0.0
    %v1572 = vmax.f32 %v1556, 0.0
    %v1573 = vmax.f32 %v1557, 0.0
    %v1574 = vmax.f32 %v1558, 0.0
    %v1575 = vmax.f32 %v1559, 0.0
    %v1576 = vmax.f32 %v1560, 0.0
    %v1577 = vmax.f32 %v1561, 0.0
    %v1578 = vmax.f32 %v1562, 0.0
    %v1579 = vmax.f32 %v1563, 0.0
    %v1580 = vmax.f32 %v1564, 0.0
    %v1581 = vmax.f32 %v1565, 0.0
    %v1582 = vmax.f32 %v1566, 0.0
    %v1583 = vmax.f32 %v1567, 0.0
    %v1584 = vmax.f32 %v1568, 0.0
    %v1585 = vrsqrt.pop %v1569
    %v1586 = vmul.f32 %v1569, %v1585
    %vm1587 = vcmp.eq.f32.partialorder %v1569, inf
    %v1588 = vsel %vm1587, %v1569, %v1586
    %vm1589 = vcmp.eq.f32.partialorder %v1569, 0.0
    %v1590 = vand.u32 %v1569, 2147483648
    %v1591 = vsel %vm1589, %v1590, %v1588
    %v1592 = vrsqrt.pop %v1570
    %v1593 = vmul.f32 %v1570, %v1592
    %vm1594 = vcmp.eq.f32.partialorder %v1570, inf
    %v1595 = vsel %vm1594, %v1570, %v1593
    %vm1596 = vcmp.eq.f32.partialorder %v1570, 0.0
    %v1597 = vand.u32 %v1570, 2147483648
    %v1598 = vsel %vm1596, %v1597, %v1595
    %v1599 = vrsqrt.pop %v1571
    %v1600 = vmul.f32 %v1571, %v1599
    %vm1601 = vcmp.eq.f32.partialorder %v1571, inf
    %v1602 = vsel %vm1601, %v1571, %v1600
    %vm1603 = vcmp.eq.f32.partialorder %v1571, 0.0
    %v1604 = vand.u32 %v1571, 2147483648
    %v1605 = vsel %vm1603, %v1604, %v1602
    %v1606 = vrsqrt.pop %v1572
    %v1607 = vmul.f32 %v1572, %v1606
    %vm1608 = vcmp.eq.f32.partialorder %v1572, inf
    %v1609 = vsel %vm1608, %v1572, %v1607
    %vm1610 = vcmp.eq.f32.partialorder %v1572, 0.0
    %v1611 = vand.u32 %v1572, 2147483648
    %v1612 = vsel %vm1610, %v1611, %v1609
    %v1613 = vrsqrt.pop %v1573
    %v1614 = vmul.f32 %v1573, %v1613
    %vm1615 = vcmp.eq.f32.partialorder %v1573, inf
    %v1616 = vsel %vm1615, %v1573, %v1614
    %vm1617 = vcmp.eq.f32.partialorder %v1573, 0.0
    %v1618 = vand.u32 %v1573, 2147483648
    %v1619 = vsel %vm1617, %v1618, %v1616
    %v1620 = vrsqrt.pop %v1574
    %v1621 = vmul.f32 %v1574, %v1620
    %vm1622 = vcmp.eq.f32.partialorder %v1574, inf
    %v1623 = vsel %vm1622, %v1574, %v1621
    %vm1624 = vcmp.eq.f32.partialorder %v1574, 0.0
    %v1625 = vand.u32 %v1574, 2147483648
    %v1626 = vsel %vm1624, %v1625, %v1623
    %v1627 = vrsqrt.pop %v1575
    %v1628 = vmul.f32 %v1575, %v1627
    %vm1629 = vcmp.eq.f32.partialorder %v1575, inf
    %v1630 = vsel %vm1629, %v1575, %v1628
    %vm1631 = vcmp.eq.f32.partialorder %v1575, 0.0
    %v1632 = vand.u32 %v1575, 2147483648
    %v1633 = vsel %vm1631, %v1632, %v1630
    %v1634 = vrsqrt.pop %v1576
    %v1635 = vmul.f32 %v1576, %v1634
    %vm1636 = vcmp.eq.f32.partialorder %v1576, inf
    %v1637 = vsel %vm1636, %v1576, %v1635
    %vm1638 = vcmp.eq.f32.partialorder %v1576, 0.0
    %v1639 = vand.u32 %v1576, 2147483648
    %v1640 = vsel %vm1638, %v1639, %v1637
    %v1641 = vrsqrt.pop %v1577
    %v1642 = vmul.f32 %v1577, %v1641
    %vm1643 = vcmp.eq.f32.partialorder %v1577, inf
    %v1644 = vsel %vm1643, %v1577, %v1642
    %vm1645 = vcmp.eq.f32.partialorder %v1577, 0.0
    %v1646 = vand.u32 %v1577, 2147483648
    %v1647 = vsel %vm1645, %v1646, %v1644
    %v1648 = vrsqrt.pop %v1578
    %v1649 = vmul.f32 %v1578, %v1648
    %vm1650 = vcmp.eq.f32.partialorder %v1578, inf
    %v1651 = vsel %vm1650, %v1578, %v1649
    %vm1652 = vcmp.eq.f32.partialorder %v1578, 0.0
    %v1653 = vand.u32 %v1578, 2147483648
    %v1654 = vsel %vm1652, %v1653, %v1651
    %v1655 = vrsqrt.pop %v1579
    %v1656 = vmul.f32 %v1579, %v1655
    %vm1657 = vcmp.eq.f32.partialorder %v1579, inf
    %v1658 = vsel %vm1657, %v1579, %v1656
    %vm1659 = vcmp.eq.f32.partialorder %v1579, 0.0
    %v1660 = vand.u32 %v1579, 2147483648
    %v1661 = vsel %vm1659, %v1660, %v1658
    %v1662 = vrsqrt.pop %v1580
    %v1663 = vmul.f32 %v1580, %v1662
    %vm1664 = vcmp.eq.f32.partialorder %v1580, inf
    %v1665 = vsel %vm1664, %v1580, %v1663
    %vm1666 = vcmp.eq.f32.partialorder %v1580, 0.0
    %v1667 = vand.u32 %v1580, 2147483648
    %v1668 = vsel %vm1666, %v1667, %v1665
    %v1669 = vrsqrt.pop %v1581
    %v1670 = vmul.f32 %v1581, %v1669
    %vm1671 = vcmp.eq.f32.partialorder %v1581, inf
    %v1672 = vsel %vm1671, %v1581, %v1670
    %vm1673 = vcmp.eq.f32.partialorder %v1581, 0.0
    %v1674 = vand.u32 %v1581, 2147483648
    %v1675 = vsel %vm1673, %v1674, %v1672
    %v1676 = vrsqrt.pop %v1582
    %v1677 = vmul.f32 %v1582, %v1676
    %vm1678 = vcmp.eq.f32.partialorder %v1582, inf
    %v1679 = vsel %vm1678, %v1582, %v1677
    %vm1680 = vcmp.eq.f32.partialorder %v1582, 0.0
    %v1681 = vand.u32 %v1582, 2147483648
    %v1682 = vsel %vm1680, %v1681, %v1679
    %v1683 = vrsqrt.pop %v1583
    %v1684 = vmul.f32 %v1583, %v1683
    %vm1685 = vcmp.eq.f32.partialorder %v1583, inf
    %v1686 = vsel %vm1685, %v1583, %v1684
    %vm1687 = vcmp.eq.f32.partialorder %v1583, 0.0
    %v1688 = vand.u32 %v1583, 2147483648
    %v1689 = vsel %vm1687, %v1688, %v1686
    %v1690 = vrsqrt.pop %v1584
    %v1691 = vmul.f32 %v1584, %v1690
    %vm1692 = vcmp.eq.f32.partialorder %v1584, inf
    %v1693 = vsel %vm1692, %v1584, %v1691
    %vm1694 = vcmp.eq.f32.partialorder %v1584, 0.0
    %v1695 = vand.u32 %v1584, 2147483648
    %v1696 = vsel %vm1694, %v1695, %v1693
    %v1697 = vstv %s1210
    %vm1698 = vcmp.lt.s32.totalorder %v504, %v1697
    %vm1699 = vcmp.lt.s32.totalorder %v505, %v1697
    %vm1700 = vcmp.lt.s32.totalorder %v506, %v1697
    %vm1701 = vcmp.lt.s32.totalorder %v507, %v1697
    %vm1702 = vcmp.lt.s32.totalorder %v508, %v1697
    %vm1703 = vcmp.lt.s32.totalorder %v509, %v1697
    %vm1704 = vcmp.lt.s32.totalorder %v510, %v1697
    %vm1705 = vcmp.lt.s32.totalorder %v511, %v1697
    %vm1706 = vcmp.lt.s32.totalorder %v512, %v1697
    %vm1707 = vcmp.lt.s32.totalorder %v513, %v1697
    %vm1708 = vcmp.lt.s32.totalorder %v514, %v1697
    %vm1709 = vcmp.lt.s32.totalorder %v515, %v1697
    %vm1710 = vcmp.lt.s32.totalorder %v516, %v1697
    %vm1711 = vcmp.lt.s32.totalorder %v517, %v1697
    %vm1712 = vcmp.lt.s32.totalorder %v518, %v1697
    %vm1713 = vcmp.lt.s32.totalorder %v519, %v1697
    %vm1714 = vcmp.lt.s32.totalorder %v538, %v1697
    %v1715 = vsel %vm1698, 1, 0
    %v1716 = vsel %vm1699, 1, 0
    %v1717 = vsel %vm1700, 1, 0
    %v1718 = vsel %vm1701, 1, 0
    %v1719 = vsel %vm1702, 1, 0
    %v1720 = vsel %vm1703, 1, 0
    %v1721 = vsel %vm1704, 1, 0
    %v1722 = vsel %vm1705, 1, 0
    %v1723 = vsel %vm1706, 1, 0
    %v1724 = vsel %vm1707, 1, 0
    %v1725 = vsel %vm1708, 1, 0
    %v1726 = vsel %vm1709, 1, 0
    %v1727 = vsel %vm1710, 1, 0
    %v1728 = vsel %vm1711, 1, 0
    %v1729 = vsel %vm1712, 1, 0
    %v1730 = vsel %vm1713, 1, 0
    %vm1731 = vcmp.eq.s32.totalorder %v1715, 1
    %vm1732 = vcmp.eq.s32.totalorder %v1716, 1
    %vm1733 = vcmp.eq.s32.totalorder %v1717, 1
    %vm1734 = vcmp.eq.s32.totalorder %v1718, 1
    %vm1735 = vcmp.eq.s32.totalorder %v1719, 1
    %vm1736 = vcmp.eq.s32.totalorder %v1720, 1
    %vm1737 = vcmp.eq.s32.totalorder %v1721, 1
    %vm1738 = vcmp.eq.s32.totalorder %v1722, 1
    %vm1739 = vcmp.eq.s32.totalorder %v1723, 1
    %vm1740 = vcmp.eq.s32.totalorder %v1724, 1
    %vm1741 = vcmp.eq.s32.totalorder %v1725, 1
    %vm1742 = vcmp.eq.s32.totalorder %v1726, 1
    %vm1743 = vcmp.eq.s32.totalorder %v1727, 1
    %vm1744 = vcmp.eq.s32.totalorder %v1728, 1
    %vm1745 = vcmp.eq.s32.totalorder %v1729, 1
    %vm1746 = vcmp.eq.s32.totalorder %v1730, 1
    %v1747 = vsel %vm1714, 1, 0
    %vm1748 = vcmp.eq.s32.totalorder %v1747, 1
    %vm1749 = vmand %vm1731, %vm1748
    %vm1750 = vmand %vm1732, %vm1748
    %vm1751 = vmand %vm1733, %vm1748
    %vm1752 = vmand %vm1734, %vm1748
    %vm1753 = vmand %vm1735, %vm1748
    %vm1754 = vmand %vm1736, %vm1748
    %vm1755 = vmand %vm1737, %vm1748
    %vm1756 = vmand %vm1738, %vm1748
    %vm1757 = vmand %vm1739, %vm1748
    %vm1758 = vmand %vm1740, %vm1748
    %vm1759 = vmand %vm1741, %vm1748
    %vm1760 = vmand %vm1742, %vm1748
    %vm1761 = vmand %vm1743, %vm1748
    %vm1762 = vmand %vm1744, %vm1748
    %vm1763 = vmand %vm1745, %vm1748
    %vm1764 = vmand %vm1746, %vm1748
    %v1765 = vsel %vm1749, %v1591, inf
    %v1766 = vsel %vm1750, %v1598, inf
    %v1767 = vsel %vm1751, %v1605, inf
    %v1768 = vsel %vm1752, %v1612, inf
    %v1769 = vsel %vm1753, %v1619, inf
    %v1770 = vsel %vm1754, %v1626, inf
    %v1771 = vsel %vm1755, %v1633, inf
    %v1772 = vsel %vm1756, %v1640, inf
    %v1773 = vsel %vm1757, %v1647, inf
    %v1774 = vsel %vm1758, %v1654, inf
    %v1775 = vsel %vm1759, %v1661, inf
    %v1776 = vsel %vm1760, %v1668, inf
    %v1777 = vsel %vm1761, %v1675, inf
    %v1778 = vsel %vm1762, %v1682, inf
    %v1779 = vsel %vm1763, %v1689, inf
    %v1780 = vsel %vm1764, %v1696, inf
    %s1781 = scalar_lea.vmem [#allocation4], 256
    %1782 = vst [vmem:[%s1781] sm:$0xff] %v1765
    %1783 = vst [vmem:[%s1781 + $0x8] sm:$0xff] %v1766
    %1784 = vst [vmem:[%s1781 + $0x10] sm:$0xff] %v1767
    %1785 = vst [vmem:[%s1781 + $0x18] sm:$0xff] %v1768
    %1786 = vst [vmem:[%s1781 + $0x20] sm:$0xff] %v1769
    %1787 = vst [vmem:[%s1781 + $0x28] sm:$0xff] %v1770
    %1788 = vst [vmem:[%s1781 + $0x30] sm:$0xff] %v1771
    %1789 = vst [vmem:[%s1781 + $0x38] sm:$0xff] %v1772
    %1790 = vst [vmem:[%s1781 + $0x40] sm:$0xff] %v1773
    %1791 = vst [vmem:[%s1781 + $0x48] sm:$0xff] %v1774
    %1792 = vst [vmem:[%s1781 + $0x50] sm:$0xff] %v1775
    %1793 = vst [vmem:[%s1781 + $0x58] sm:$0xff] %v1776
    %1794 = vst [vmem:[%s1781 + $0x60] sm:$0xff] %v1777
    %1795 = vst [vmem:[%s1781 + $0x68] sm:$0xff] %v1778
    %1796 = vst [vmem:[%s1781 + $0x70] sm:$0xff] %v1779
    %1797 = vst [vmem:[%s1781 + $0x78] sm:$0xff] %v1780
    // Predicated region
    $region6: #{topological_persistence_loss.1} parent=1 // pred_check
      _
    $region7: #{topological_persistence_loss.1} parent=1 // pred_check_branch
      %1799 = sbr.rel (0) target = $region9
    $region8: #{topological_persistence_loss.1} parent=1 // pred_region
      %s1801 = ssub.s32 6144, 6144
      %1802 = vsyncadd [#allocation5], %s1801
      %s1803 = sshll.u32 [#allocation4], 4
      %s1804 = int_to_ptr.vmem [resolvable:$true] %s1803
      %1809 = dma.vmem_to_hbm [thread:$0]  %s1804, 6144, %s2, [#allocation5], 128, 128, 8
    $region9: #{topological_persistence_loss.1} parent=1 // pred_fallthru
      _
    // Predicated region
    $region10: #{topological_persistence_loss.1} parent=1 // pred_check
      _
    $region11: #{topological_persistence_loss.1} parent=1 // pred_check_branch
      %1811 = sbr.rel (0) target = $region13
    $region12: #{topological_persistence_loss.1} parent=1 // pred_region
      %1812 = dma.done [#allocation5], 6144
    $region13: #{topological_persistence_loss.1} parent=1 // pred_fallthru
      _
    %1813 = vsyncpa [#allocation5], 1

</llo_original>
